<compile_context>
chip_gen: v7x
topology: tpu7x:2x2x1
jax: 0.10.0
libtpu: 0.0.40
codegen_flags: <defaults>
</compile_context>

<pallas_src>
import functools

import jax
import jax.numpy as jnp
from jax.experimental import pallas as pl
from jax.experimental.pallas import tpu as pltpu


def _attention_kernel(f_ref, g_ref, wf_ref, bf_ref, wc_ref, bc_ref,
                      alpha_ref, gap_ref, m_sc, l_sc, acc_sc, *, inv_n):
    """Grid = (batch, spatial tile).  Shapes seen by the kernel:

    f_ref     : (1, Cf, TN)  bf16  feature tile, channels-first
    g_ref     : (1, Ci, TN)  bf16  upsampled global intermediate tile
    wf_ref    : (Ci, Cf)     bf16  feature_layer 1x1x1 weight (transposed)
    bf_ref    : (Ci, 1)      f32   feature_layer bias
    wc_ref    : (1, Ci)      f32   to_1_channel weight
    bc_ref    : (1, 1)       f32   to_1_channel bias
    alpha_ref : (1, K, TN)   f32   resident per-batch score/alpha buffer
    gap_ref   : (1, Cf, 1)   f32   GAP(alpha * feature)
    m_sc/l_sc : (1, 1)       f32   online-softmax running max / sum(exp)
    acc_sc    : (Cf, 1)      f32   running sum of exp(score) * feature
    """
    k = pl.program_id(1)
    nk = pl.num_programs(1)

    @pl.when(k == 0)
    def _init():
        m_sc[...] = jnp.full_like(m_sc, -jnp.inf)
        l_sc[...] = jnp.zeros_like(l_sc)
        acc_sc[...] = jnp.zeros_like(acc_sc)

    f_bf = f_ref[0]                                    # (Cf, TN) bf16
    f = f_bf.astype(jnp.float32)
    g = g_ref[0].astype(jnp.float32)                   # (Ci, TN) f32

    # feature 1x1x1 conv on the MXU (bf16 x bf16 -> f32); bias + global + ReLU
    # on the VPU in f32 (safe on v5e which has no bf16 VPU).
    inter = jnp.dot(wf_ref[...], f_bf, preferred_element_type=jnp.float32)
    s = jnp.maximum(inter + bf_ref[...] + g, 0.0)      # (Ci, TN) f32

    # to_1_channel 1x1x1 conv as an MXU mat-vec -> lane-dense (1, TN) scores
    compat = jnp.dot(wc_ref[...], s,
                     preferred_element_type=jnp.float32) + bc_ref[...]

    # stage raw scores in the resident per-batch buffer (normalized at last tile)
    alpha_ref[0, pl.ds(k, 1), :] = compat

    # ---- online softmax statistics + weighted-feature accumulator (f32) ----
    m_prev = m_sc[...]
    m_new = jnp.maximum(m_prev, jnp.max(compat, axis=-1, keepdims=True))
    corr = jnp.exp(m_prev - m_new)
    e = jnp.exp(compat - m_new)                        # (1, TN)
    l_sc[...] = corr * l_sc[...] + jnp.sum(e, axis=-1, keepdims=True)
    acc_sc[...] = corr * acc_sc[...] + jnp.sum(f * e, axis=-1, keepdims=True)
    m_sc[...] = m_new

    @pl.when(k == nk - 1)
    def _finalize():
        inv_l = pl.reciprocal(l_sc[...], approx=True)  # EUP, once per batch elem
        scores = alpha_ref[0]                          # (K, TN) raw scores
        alpha_ref[0] = jnp.exp(scores - m_sc[...]) * inv_l
        # AdaptiveAvgPool3d((1,1,1)) of alpha*feature == sum / N
        gap_ref[0] = acc_sc[...] * (inv_l * inv_n)


def _choose_tile(n, max_tile):
    """Largest lane-aligned (multiple of 128) tile <= max_tile that divides n."""
    if n <= max_tile:
        return n
    t = (max_tile // 128) * 128
    while t >= 128:
        if n % t == 0:
            return t
        t -= 128
    return n  # no aligned divisor: fall back to a single full-length block


@functools.partial(jax.jit, static_argnames=("max_tile", "stream_dtype"))
def attention_layer_3d(feature, global_t, wf_t, bf, wg_t, wc, bc,
                       *, max_tile=32768, stream_dtype=jnp.bfloat16):
    """feature: (B, Cf, D, H, W), global_t: (B, Cg, Dg, Hg, Wg).

    wf_t: (Ci, Cf) feature_layer weight   bf: (Ci,) feature_layer bias
    wg_t: (Ci, Cg) global_layer weight (no bias)
    wc  : (Ci,)    to_1_channel weight    bc: ()    to_1_channel bias
    Returns (alpha, gap) with shapes (B, 1, D, H, W) and (B, Cf, 1, 1, 1).
    """
    B, Cf, D, H, W = feature.shape
    Ci = wf_t.shape[0]
    N = D * H * W
    tn = _choose_tile(N, max_tile)
    K = N // tn
    hp = jax.lax.Precision.HIGHEST

    # --- JAX glue (layout + upsample only; all heavy streaming in the kernel) --
    # channels-first + flattened spatial: pure reshape of NCDHW (no copy)
    f2 = feature.reshape(B, Cf, N).astype(stream_dtype)

    # global 1x1x1 conv (bias-free) then trilinear upsample -- the PyTorch order.
    inter_g = jnp.einsum("ic,bcdhw->bidhw", wg_t, global_t, precision=hp)
    g_up = jax.image.resize(inter_g, (B, Ci, D, H, W), method="trilinear")
    g2 = g_up.reshape(B, Ci, N).astype(stream_dtype)

    wf_s = wf_t.astype(stream_dtype)
    bf2 = bf.reshape(Ci, 1).astype(jnp.float32)
    wc2 = wc.reshape(1, Ci).astype(jnp.float32)
    bc2 = bc.reshape(1, 1).astype(jnp.float32)

    itemsize = jnp.dtype(stream_dtype).itemsize
    vmem_need = (2 * (Cf + Ci) * tn * itemsize     # double-buffered f/g tiles
                 + 2 * K * tn * 4                  # resident alpha block (+wb buf)
                 + (4 << 20))                      # weights, scratch, headroom
    vmem_limit = int(min(64 << 20, max(16 << 20, vmem_need)))

    flops = int(B * N * (2 * Cf * Ci + 5 * Ci + 2 * Cf + 8))
    transcendentals = int(2 * B * N)
    bytes_accessed = int(B * N * ((Cf + Ci) * itemsize + 4) + B * Cf * 4
                         + Ci * (Cf + 3) * 4)

    alpha3, gap2 = pl.pallas_call(
        functools.partial(_attention_kernel, inv_n=float(1.0 / N)),
        out_shape=(
            jax.ShapeDtypeStruct((B, K, tn), jnp.float32),
            jax.ShapeDtypeStruct((B, Cf, 1), jnp.float32),
        ),
        grid_spec=pltpu.PrefetchScalarGridSpec(
            num_scalar_prefetch=0,
            grid=(B, K),
            in_specs=[
                pl.BlockSpec((1, Cf, tn), lambda b, k: (b, 0, k)),
                pl.BlockSpec((1, Ci, tn), lambda b, k: (b, 0, k)),
                pl.BlockSpec((Ci, Cf), lambda b, k: (0, 0)),
                pl.BlockSpec((Ci, 1), lambda b, k: (0, 0)),
                pl.BlockSpec((1, Ci), lambda b, k: (0, 0)),
                pl.BlockSpec((1, 1), lambda b, k: (0, 0)),
            ],
            out_specs=[
                pl.BlockSpec((1, K, tn), lambda b, k: (b, 0, 0)),
                pl.BlockSpec((1, Cf, 1), lambda b, k: (b, 0, 0)),
            ],
            scratch_shapes=[
                pltpu.VMEM((1, 1), jnp.float32),    # running max
                pltpu.VMEM((1, 1), jnp.float32),    # running sum(exp)
                pltpu.VMEM((Cf, 1), jnp.float32),   # running sum(exp * feature)
            ],
        ),
        compiler_params=pltpu.CompilerParams(
            dimension_semantics=("parallel", "arbitrary"),
            vmem_limit_bytes=vmem_limit,
        ),
        cost_estimate=pl.CostEstimate(
            flops=flops, transcendentals=transcendentals,
            bytes_accessed=bytes_accessed),
    )(f2, g2, wf_s, bf2, wc2, bc2)

    alpha = alpha3.reshape(B, 1, D, H, W)   # K*tn == N, row-major: free reshape
    gap = gap2.reshape(B, Cf, 1, 1, 1)
    return alpha, gap


def make_params(key, feature_channels, global_channels, inter_channel):
    """kaiming_normal_(mode='fan_out') init (fan_out = out_channels for 1x1x1
    convs), zero biases -- matching _initialize_weights in the PyTorch module."""
    k1, k2, k3 = jax.random.split(key, 3)
    wf_t = jax.random.normal(k1, (inter_channel, feature_channels), jnp.float32) \
        * jnp.sqrt(2.0 / inter_channel)
    bf = jnp.zeros((inter_channel,), jnp.float32)
    wg_t = jax.random.normal(k2, (inter_channel, global_channels), jnp.float32) \
        * jnp.sqrt(2.0 / inter_channel)
    wc = jax.random.normal(k3, (inter_channel,), jnp.float32) * jnp.sqrt(2.0)
    bc = jnp.zeros((), jnp.float32)
    return dict(wf_t=wf_t, bf=bf, wg_t=wg_t, wc=wc, bc=bc)


def reference(feature, global_t, wf_t, bf, wg_t, wc, bc):
    """Pure-JAX f32 forward matching the PyTorch module (conv -> upsample)."""
    B, Cf, D, H, W = feature.shape
    Ci = wf_t.shape[0]
    hp = jax.lax.Precision.HIGHEST
    inter_g = jnp.einsum("ic,bcdhw->bidhw", wg_t, global_t, precision=hp)
    g_up = jax.image.resize(inter_g, (B, Ci, D, H, W), method="trilinear")
    inter_f = jnp.einsum("ic,bcdhw->bidhw", wf_t, feature, precision=hp) \
        + bf.reshape(1, Ci, 1, 1, 1)
    s = jax.nn.relu(inter_f + g_up)
    compat = jnp.einsum("bidhw,i->bdhw", s, wc, precision=hp) + bc
    alpha = jax.nn.softmax(compat.reshape(B, -1), axis=1).reshape(B, 1, D, H, W)
    gap = jnp.mean(alpha * feature, axis=(2, 3, 4), keepdims=True)
    return alpha, gap


if __name__ == "__main__":
    key = jax.random.PRNGKey(0)
    kf, kg, kp = jax.random.split(key, 3)

    # Small shapes consistent with the module:
    B, Cf, D, H, W = 2, 8, 16, 16, 16       # feature_size
    Cg, Dg, Hg, Wg = 16, 8, 8, 8            # global_size (coarser, upsampled)
    Ci = 16                                 # inter_channel

    feature = jax.random.normal(kf, (B, Cf, D, H, W), jnp.float32)
    global_t = jax.random.normal(kg, (B, Cg, Dg, Hg, Wg), jnp.float32)
    params = make_params(kp, Cf, Cg, Ci)

    # max_tile=1024 => N=4096 splits into K=4 spatial tiles, exercising the
    # online-softmax / multi-tile path of the kernel.
    alpha, gap = attention_layer_3d(
        feature, global_t, params["wf_t"], params["bf"],
        params["wg_t"], params["wc"], params["bc"], max_tile=1024)
    jax.block_until_ready((alpha, gap))

    assert alpha.shape == (B, 1, D, H, W)
    assert gap.shape == (B, Cf, 1, 1, 1)
    assert bool(jnp.all(jnp.isfinite(alpha))) and bool(jnp.all(jnp.isfinite(gap)))
    # softmax over the flattened spatial volume sums to ~1 per batch element
    assert jnp.allclose(jnp.sum(alpha, axis=(2, 3, 4)), 1.0, atol=1e-2)

    # Compare against the full-precision reference.  The tolerance absorbs the
    # bf16 streaming quantization of f/g/wf, which the (peaked) softmax
    # amplifies into a few-percent relative error on alpha; all in-kernel math
    # (ReLU, softmax, accumulation) is f32.
    a_ref, g_ref = reference(feature, global_t, params["wf_t"], params["bf"],
                             params["wg_t"], params["wc"], params["bc"])
    assert jnp.allclose(alpha, a_ref, rtol=5e-2, atol=2e-3), "alpha mismatch"
    assert jnp.allclose(gap, g_ref, rtol=5e-2, atol=1e-4), "gap mismatch"

    print("KERNEL_OK")
</pallas_src>

<mosaic_0001>
module attributes {stable_mosaic.version = 11 : i64} {
  func.func @_attention_kernel(%arg0: i32, %arg1: i32, %arg2: memref<1x8x1024xbf16, #tpu.memory_space<vmem>>, %arg3: memref<1x16x1024xbf16, #tpu.memory_space<vmem>>, %arg4: memref<16x8xbf16, #tpu.memory_space<vmem>>, %arg5: memref<16x1xf32, #tpu.memory_space<vmem>>, %arg6: memref<1x16xf32, #tpu.memory_space<vmem>>, %arg7: memref<1x1xf32, #tpu.memory_space<vmem>>, %arg8: memref<1x4x1024xf32, #tpu.memory_space<vmem>>, %arg9: memref<1x8x1xf32, #tpu.memory_space<vmem>>, %arg10: memref<1x1xf32, #tpu.memory_space<vmem>>, %arg11: memref<1x1xf32, #tpu.memory_space<vmem>>, %arg12: memref<8x1xf32, #tpu.memory_space<vmem>>) attributes {dimension_semantics = [#tpu.dimension_semantics<parallel>, #tpu.dimension_semantics<arbitrary>], iteration_bounds = array<i64: 2, 4>, scalar_prefetch = 0 : i64, scratch_operands = 3 : i64, tpu.core_type = #tpu.core_type<tc>, window_params = [{transform_indices = @transform_0, window_bounds = array<i64: 1, 8, 1024>}, {transform_indices = @transform_1, window_bounds = array<i64: 1, 16, 1024>}, {pipeline_mode = #tpu.pipeline_mode<synchronous>, transform_indices = @transform_2, window_bounds = array<i64: 16, 8>}, {pipeline_mode = #tpu.pipeline_mode<synchronous>, transform_indices = @transform_3, window_bounds = array<i64: 16, 1>}, {pipeline_mode = #tpu.pipeline_mode<synchronous>, transform_indices = @transform_4, window_bounds = array<i64: 1, 16>}, {pipeline_mode = #tpu.pipeline_mode<synchronous>, transform_indices = @transform_5, window_bounds = array<i64: 1, 1>}, {transform_indices = @transform_6, window_bounds = array<i64: 1, 4, 1024>}, {transform_indices = @transform_7, window_bounds = array<i64: 1, 8, 1>}]} {
    %c0_i32 = arith.constant 0 : i32
    %0 = arith.cmpi eq, %arg1, %c0_i32 : i32
    %1 = arith.extui %0 : i1 to i32
    %c0_i32_0 = arith.constant 0 : i32
    %2 = arith.cmpi ne, %1, %c0_i32_0 : i32
    scf.if %2 {
      %cst_34 = arith.constant 0xFF800000 : f32
      %54 = vector.broadcast %cst_34 : f32 to vector<1x1xf32>
      %c0_35 = arith.constant 0 : index
      %c0_36 = arith.constant 0 : index
      %55 = vector.load %arg10[%c0_35, %c0_36] : memref<1x1xf32, #tpu.memory_space<vmem>>, vector<1x1xf32>
      tpu.vector_store %arg10[%c0_35, %c0_36], %54 {strides = array<i32>} : memref<1x1xf32, #tpu.memory_space<vmem>>, vector<1x1xf32>,
      %cst_37 = arith.constant 0.000000e+00 : f32
      %56 = vector.broadcast %cst_37 : f32 to vector<1x1xf32>
      %c0_38 = arith.constant 0 : index
      %c0_39 = arith.constant 0 : index
      %57 = vector.load %arg11[%c0_38, %c0_39] : memref<1x1xf32, #tpu.memory_space<vmem>>, vector<1x1xf32>
      tpu.vector_store %arg11[%c0_38, %c0_39], %56 {strides = array<i32>} : memref<1x1xf32, #tpu.memory_space<vmem>>, vector<1x1xf32>,
      %cst_40 = arith.constant 0.000000e+00 : f32
      %58 = vector.broadcast %cst_40 : f32 to vector<8x1xf32>
      %c0_41 = arith.constant 0 : index
      %c0_42 = arith.constant 0 : index
      %59 = vector.load %arg12[%c0_41, %c0_42] : memref<8x1xf32, #tpu.memory_space<vmem>>, vector<8x1xf32>
      tpu.vector_store %arg12[%c0_41, %c0_42], %58 {strides = array<i32>} : memref<8x1xf32, #tpu.memory_space<vmem>>, vector<8x1xf32>,
    } else {
    }
    %c0 = arith.constant 0 : index
    %c0_1 = arith.constant 0 : index
    %c0_2 = arith.constant 0 : index
    %3 = vector.load %arg2[%c0, %c0_1, %c0_2] : memref<1x8x1024xbf16, #tpu.memory_space<vmem>>, vector<1x8x1024xbf16>
    %4 = vector.shape_cast %3 : vector<1x8x1024xbf16> to vector<8x1024xbf16>
    %5 = arith.extf %4 : vector<8x1024xbf16> to vector<8x1024xf32>
    %c0_3 = arith.constant 0 : index
    %c0_4 = arith.constant 0 : index
    %c0_5 = arith.constant 0 : index
    %6 = vector.load %arg3[%c0_3, %c0_4, %c0_5] : memref<1x16x1024xbf16, #tpu.memory_space<vmem>>, vector<1x16x1024xbf16>
    %7 = vector.shape_cast %6 : vector<1x16x1024xbf16> to vector<16x1024xbf16>
    %8 = arith.extf %7 : vector<16x1024xbf16> to vector<16x1024xf32>
    %c0_6 = arith.constant 0 : index
    %c0_7 = arith.constant 0 : index
    %9 = vector.load %arg4[%c0_6, %c0_7] : memref<16x8xbf16, #tpu.memory_space<vmem>>, vector<16x8xbf16>
    %cst = arith.constant dense<0.000000e+00> : vector<16x1024xf32>
    %10 = tpu.matmul %9, %4, %cst {dimension_numbers = #tpu.dot_dimension_numbers<[1], [0], [0], [1], [0, 0, 1, 1], [], []>} : vector<16x8xbf16>, vector<8x1024xbf16>, vector<16x1024xf32> -> vector<16x1024xf32>
    %c0_8 = arith.constant 0 : index
    %c0_9 = arith.constant 0 : index
    %11 = vector.load %arg5[%c0_8, %c0_9] : memref<16x1xf32, #tpu.memory_space<vmem>>, vector<16x1xf32>
    %12 = vector.broadcast %11 : vector<16x1xf32> to vector<16x1024xf32>
    %13 = arith.addf %10, %12 : vector<16x1024xf32>
    %14 = arith.addf %13, %8 : vector<16x1024xf32>
    %cst_10 = arith.constant 0.000000e+00 : f32
    %15 = vector.broadcast %cst_10 : f32 to vector<16x1024xf32>
    %16 = arith.maximumf %14, %15 : vector<16x1024xf32>
    %c0_11 = arith.constant 0 : index
    %c0_12 = arith.constant 0 : index
    %17 = vector.load %arg6[%c0_11, %c0_12] : memref<1x16xf32, #tpu.memory_space<vmem>>, vector<1x16xf32>
    %cst_13 = arith.constant dense<0.000000e+00> : vector<1x1024xf32>
    %18 = tpu.matmul %17, %16, %cst_13 {dimension_numbers = #tpu.dot_dimension_numbers<[1], [0], [0], [1], [0, 0, 1, 1], [], []>} : vector<1x16xf32>, vector<16x1024xf32>, vector<1x1024xf32> -> vector<1x1024xf32>
    %c0_14 = arith.constant 0 : index
    %c0_15 = arith.constant 0 : index
    %19 = vector.load %arg7[%c0_14, %c0_15] : memref<1x1xf32, #tpu.memory_space<vmem>>, vector<1x1xf32>
    %20 = vector.broadcast %19 : vector<1x1xf32> to vector<1x1024xf32>
    %21 = arith.addf %18, %20 : vector<1x1024xf32>
    %c0_16 = arith.constant 0 : index
    %22 = arith.index_cast %arg1 : i32 to index
    %c0_17 = arith.constant 0 : index
    %23 = vector.load %arg8[%c0_16, %22, %c0_17] : memref<1x4x1024xf32, #tpu.memory_space<vmem>>, vector<1x1x1024xf32>
    %24 = vector.shape_cast %23 : vector<1x1x1024xf32> to vector<1x1024xf32>
    %25 = vector.shape_cast %21 : vector<1x1024xf32> to vector<1x1x1024xf32>
    tpu.vector_store %arg8[%c0_16, %22, %c0_17], %25 {strides = array<i32>} : memref<1x4x1024xf32, #tpu.memory_space<vmem>>, vector<1x1x1024xf32>,
    %c0_18 = arith.constant 0 : index
    %c0_19 = arith.constant 0 : index
    %26 = vector.load %arg10[%c0_18, %c0_19] : memref<1x1xf32, #tpu.memory_space<vmem>>, vector<1x1xf32>
    %cst_20 = arith.constant dense<0xFF800000> : vector<1xf32>
    %27 = vector.multi_reduction <maximumf>, %21, %cst_20 [1] : vector<1x1024xf32> to vector<1xf32>
    %28 = vector.shape_cast %27 : vector<1xf32> to vector<1x1xf32>
    %29 = arith.maximumf %26, %28 : vector<1x1xf32>
    %30 = arith.subf %26, %29 : vector<1x1xf32>
    %31 = math.exp %30 : vector<1x1xf32>
    %32 = vector.broadcast %29 : vector<1x1xf32> to vector<1x1024xf32>
    %33 = arith.subf %21, %32 : vector<1x1024xf32>
    %34 = math.exp %33 : vector<1x1024xf32>
    %c0_21 = arith.constant 0 : index
    %c0_22 = arith.constant 0 : index
    %35 = vector.load %arg11[%c0_21, %c0_22] : memref<1x1xf32, #tpu.memory_space<vmem>>, vector<1x1xf32>
    %36 = arith.mulf %31, %35 : vector<1x1xf32>
    %cst_23 = arith.constant dense<0.000000e+00> : vector<1xf32>
    %37 = vector.multi_reduction <add>, %34, %cst_23 [1] : vector<1x1024xf32> to vector<1xf32>
    %38 = vector.shape_cast %37 : vector<1xf32> to vector<1x1xf32>
    %39 = arith.addf %36, %38 : vector<1x1xf32>
    %c0_24 = arith.constant 0 : index
    %c0_25 = arith.constant 0 : index
    %40 = vector.load %arg11[%c0_24, %c0_25] : memref<1x1xf32, #tpu.memory_space<vmem>>, vector<1x1xf32>
    tpu.vector_store %arg11[%c0_24, %c0_25], %39 {strides = array<i32>} : memref<1x1xf32, #tpu.memory_space<vmem>>, vector<1x1xf32>,
    %c0_26 = arith.constant 0 : index
    %c0_27 = arith.constant 0 : index
    %41 = vector.load %arg12[%c0_26, %c0_27] : memref<8x1xf32, #tpu.memory_space<vmem>>, vector<8x1xf32>
    %42 = vector.broadcast %31 : vector<1x1xf32> to vector<8x1xf32>
    %43 = arith.mulf %42, %41 : vector<8x1xf32>
    %44 = vector.broadcast %34 : vector<1x1024xf32> to vector<8x1024xf32>
    %45 = arith.mulf %5, %44 : vector<8x1024xf32>
    %cst_28 = arith.constant dense<0.000000e+00> : vector<8xf32>
    %46 = vector.multi_reduction <add>, %45, %cst_28 [1] : vector<8x1024xf32> to vector<8xf32>
    %47 = vector.shape_cast %46 : vector<8xf32> to vector<8x1xf32>
    %48 = arith.addf %43, %47 : vector<8x1xf32>
    %c0_29 = arith.constant 0 : index
    %c0_30 = arith.constant 0 : index
    %49 = vector.load %arg12[%c0_29, %c0_30] : memref<8x1xf32, #tpu.memory_space<vmem>>, vector<8x1xf32>
    tpu.vector_store %arg12[%c0_29, %c0_30], %48 {strides = array<i32>} : memref<8x1xf32, #tpu.memory_space<vmem>>, vector<8x1xf32>,
    %c0_31 = arith.constant 0 : index
    %c0_32 = arith.constant 0 : index
    %50 = vector.load %arg10[%c0_31, %c0_32] : memref<1x1xf32, #tpu.memory_space<vmem>>, vector<1x1xf32>
    tpu.vector_store %arg10[%c0_31, %c0_32], %29 {strides = array<i32>} : memref<1x1xf32, #tpu.memory_space<vmem>>, vector<1x1xf32>,
    %c3_i32 = arith.constant 3 : i32
    %51 = arith.cmpi eq, %arg1, %c3_i32 : i32
    %52 = arith.extui %51 : i1 to i32
    %c0_i32_33 = arith.constant 0 : i32
    %53 = arith.cmpi ne, %52, %c0_i32_33 : i32
    scf.if %53 {
      %c0_34 = arith.constant 0 : index
      %c0_35 = arith.constant 0 : index
      %54 = vector.load %arg11[%c0_34, %c0_35] : memref<1x1xf32, #tpu.memory_space<vmem>>, vector<1x1xf32>
      %55 = tpu.reciprocal %54 {approx = true} : vector<1x1xf32> -> vector<1x1xf32>
      %c0_36 = arith.constant 0 : index
      %c0_37 = arith.constant 0 : index
      %c0_38 = arith.constant 0 : index
      %56 = vector.load %arg8[%c0_36, %c0_37, %c0_38] : memref<1x4x1024xf32, #tpu.memory_space<vmem>>, vector<1x4x1024xf32>
      %57 = vector.shape_cast %56 : vector<1x4x1024xf32> to vector<4x1024xf32>
      %c0_39 = arith.constant 0 : index
      %c0_40 = arith.constant 0 : index
      %58 = vector.load %arg10[%c0_39, %c0_40] : memref<1x1xf32, #tpu.memory_space<vmem>>, vector<1x1xf32>
      %59 = vector.broadcast %58 : vector<1x1xf32> to vector<4x1024xf32>
      %60 = arith.subf %57, %59 : vector<4x1024xf32>
      %61 = math.exp %60 : vector<4x1024xf32>
      %62 = vector.broadcast %55 : vector<1x1xf32> to vector<4x1024xf32>
      %63 = arith.mulf %61, %62 : vector<4x1024xf32>
      %c0_41 = arith.constant 0 : index
      %c0_42 = arith.constant 0 : index
      %c0_43 = arith.constant 0 : index
      %64 = vector.load %arg8[%c0_41, %c0_42, %c0_43] : memref<1x4x1024xf32, #tpu.memory_space<vmem>>, vector<1x4x1024xf32>
      %65 = vector.shape_cast %64 : vector<1x4x1024xf32> to vector<4x1024xf32>
      %66 = vector.shape_cast %63 : vector<4x1024xf32> to vector<1x4x1024xf32>
      tpu.vector_store %arg8[%c0_41, %c0_42, %c0_43], %66 {strides = array<i32>} : memref<1x4x1024xf32, #tpu.memory_space<vmem>>, vector<1x4x1024xf32>,
      %c0_44 = arith.constant 0 : index
      %c0_45 = arith.constant 0 : index
      %67 = vector.load %arg12[%c0_44, %c0_45] : memref<8x1xf32, #tpu.memory_space<vmem>>, vector<8x1xf32>
      %cst_46 = arith.constant 2.44140625E-4 : f32
      %68 = vector.broadcast %cst_46 : f32 to vector<1x1xf32>
      %69 = arith.mulf %55, %68 : vector<1x1xf32>
      %70 = vector.broadcast %69 : vector<1x1xf32> to vector<8x1xf32>
      %71 = arith.mulf %67, %70 : vector<8x1xf32>
      %c0_47 = arith.constant 0 : index
      %c0_48 = arith.constant 0 : index
      %c0_49 = arith.constant 0 : index
      %72 = vector.load %arg9[%c0_47, %c0_48, %c0_49] : memref<1x8x1xf32, #tpu.memory_space<vmem>>, vector<1x8x1xf32>
      %73 = vector.shape_cast %72 : vector<1x8x1xf32> to vector<8x1xf32>
      %74 = vector.shape_cast %71 : vector<8x1xf32> to vector<1x8x1xf32>
      tpu.vector_store %arg9[%c0_47, %c0_48, %c0_49], %74 {strides = array<i32>} : memref<1x8x1xf32, #tpu.memory_space<vmem>>, vector<1x8x1xf32>,
    } else {
    }
    return
  }
  func.func @transform_0(%arg0: i32, %arg1: i32) -> (i32, i32, i32) {
    %c0_i32 = arith.constant 0 : i32
    %c0_i32_0 = arith.constant 0 : i32
    return %arg0, %c0_i32, %arg1 : i32, i32, i32
  }
  func.func @transform_1(%arg0: i32, %arg1: i32) -> (i32, i32, i32) {
    %c0_i32 = arith.constant 0 : i32
    %c0_i32_0 = arith.constant 0 : i32
    return %arg0, %c0_i32, %arg1 : i32, i32, i32
  }
  func.func @transform_2(%arg0: i32, %arg1: i32) -> (i32, i32) {
    %c0_i32 = arith.constant 0 : i32
    %c0_i32_0 = arith.constant 0 : i32
    %c0_i32_1 = arith.constant 0 : i32
    return %c0_i32, %c0_i32_0 : i32, i32
  }
  func.func @transform_3(%arg0: i32, %arg1: i32) -> (i32, i32) {
    %c0_i32 = arith.constant 0 : i32
    %c0_i32_0 = arith.constant 0 : i32
    %c0_i32_1 = arith.constant 0 : i32
    return %c0_i32, %c0_i32_0 : i32, i32
  }
  func.func @transform_4(%arg0: i32, %arg1: i32) -> (i32, i32) {
    %c0_i32 = arith.constant 0 : i32
    %c0_i32_0 = arith.constant 0 : i32
    %c0_i32_1 = arith.constant 0 : i32
    return %c0_i32, %c0_i32_0 : i32, i32
  }
  func.func @transform_5(%arg0: i32, %arg1: i32) -> (i32, i32) {
    %c0_i32 = arith.constant 0 : i32
    %c0_i32_0 = arith.constant 0 : i32
    %c0_i32_1 = arith.constant 0 : i32
    return %c0_i32, %c0_i32_0 : i32, i32
  }
  func.func @transform_6(%arg0: i32, %arg1: i32) -> (i32, i32, i32) {
    %c0_i32 = arith.constant 0 : i32
    %c0_i32_0 = arith.constant 0 : i32
    %c0_i32_1 = arith.constant 0 : i32
    return %arg0, %c0_i32, %c0_i32_0 : i32, i32, i32
  }
  func.func @transform_7(%arg0: i32, %arg1: i32) -> (i32, i32, i32) {
    %c0_i32 = arith.constant 0 : i32
    %c0_i32_0 = arith.constant 0 : i32
    %c0_i32_1 = arith.constant 0 : i32
    return %arg0, %c0_i32, %c0_i32_0 : i32, i32, i32
  }
}

</mosaic_0001>

<llo_original>
// kernel: attention_layer_3d.1
$region0: #{attention_layer_3d.1}
  #allocation0 [shape = 'u32[]', space=smem, size = 0x4, offset = 0x4, fixed_abs, tag = 'smem constant byte address 0x4 - core index']
  #allocation1 [shape = 'u32[144,128]{1,0:T(1,128)}', space=vmem, size = 0x12000, scoped, tag = 'internal scratch']
  #allocation2 [shape = 'f32[1,1]{1,0:T(1,128)}', space=vmem, size = 0x200, scoped, tag = 'scratch operand']
  #allocation3 [shape = 'f32[1,1]{1,0:T(1,128)}', space=vmem, size = 0x200, scoped, tag = 'scratch operand']
  #allocation4 [shape = 'f32[8,1]{1,0:T(8,128)}', space=vmem, size = 0x1000, scoped, tag = 'scratch operand']
  #allocation5 [shape = 'f32[1,1]{1,0:T(1,128)S(1)}', space=vmem, size = 0x200, scoped, tag = 'scoped memory for attention_layer_3d.1']
  %s0 = inlined_call_operand.vmem [shape: bf16[2,8,4096], index: 0, kind: input, shape index: {}]
  %s1 = inlined_call_operand.vmem [shape: bf16[2,16,4096], index: 1, kind: input, shape index: {}]
  %s2 = inlined_call_operand.vmem [shape: bf16[16,8], index: 2, kind: input, shape index: {}]
  %s3 = inlined_call_operand.vmem [shape: f32[16,1], index: 3, kind: input, shape index: {}]
  %s4 = inlined_call_operand.vmem [shape: f32[1,16], index: 4, kind: input, shape index: {}]
  %s5 = inlined_call_operand.<no memory space> [shape: f32[1,1], index: 5, kind: input, shape index: {}]
  %s6 = inlined_call_operand.vmem [shape: f32[2,4,1024], index: 6, kind: output, shape index: {0}]
  %s7 = inlined_call_operand.vmem [shape: f32[2,8,1], index: 7, kind: output, shape index: {1}]
  %8 = xla_tuple %s6, %s7
  %s9 = sld [smem:[#allocation0]]
  $region96: #{attention_layer_3d.1} parent=0
    _
  %s11 = ssub.s32 1, %s9
  %s12 = scalar_select 0, %s11, %s9
  %v13 = vstv %s5
  %14 = vst [vmem:[#allocation5] sm:$0x1] %v13
  $region1: #{attention_layer_3d.1} parent=0
    #allocation6 [shape = 'u8[65536]{0}', space=vmem, size = 0x10000, scoped, tag = 'input window, operand 1']
    loop: start=0, step=1, limit=10
    $region2: #{attention_layer_3d.1} parent=1 // loop_pre_header
      _
    $region3: #{attention_layer_3d.1} parent=1 // loop_header
      %s16 = sphi 0, %s20
      %p17 = scmp.ge.s32.totalorder %s16, 10
      %s23 = sphi 0, %s35
      %s24 = sphi 0, %s31
      %s25 = sphi 0, %s23
      %s26 = sphi 0, %s24
      %s27 = sphi 0, %s25
      %s28 = sphi 0, %s26
      %s40 = sphi 0, %s42
      %s43 = sphi 0, %s40
      %s44 = sphi 0, %s43
      %s60 = sphi 0, %s44
      %s68 = sphi 0, %s70
      %s71 = sphi 0, %s68
      %s72 = sphi 0, %s71
      %s88 = sphi 0, %s72
      %s92 = sphi 0, %s92
      %s94 = sphi 0, %s92
      %s95 = sphi 0, %s94
      %s109 = sphi 0, %s95
      %s113 = sphi 0, %s113
      %s115 = sphi 0, %s113
      %s116 = sphi 0, %s115
      %s130 = sphi 0, %s116
      %s134 = sphi 0, %s134
      %s136 = sphi 0, %s134
      %s137 = sphi 0, %s136
      %s151 = sphi 0, %s137
      %s155 = sphi 0, %s155
      %s157 = sphi 0, %s155
      %s158 = sphi 0, %s157
      %s172 = sphi 0, %s158
      %s178 = sphi 0, %s180
      %s181 = sphi 0, %s178
      %s182 = sphi 0, %s181
      %s198 = sphi 0, %s182
      %s204 = sphi 0, %s206
      %s207 = sphi 0, %s204
      %s208 = sphi 0, %s207
      %s224 = sphi 0, %s208
    $region4: #{attention_layer_3d.1} parent=1 // loop_header_branch
      %19 = sbr.rel (%p17) target = $region8
    $region5: #{attention_layer_3d.1} parent=1 // loop_body
      %s21 = ssub.s32 %s16, 1
      %s22 = ssub.s32 %s16, 2
      %s29 = sadd.s32 1, %s24
      %p30 = scmp.ge.s32.totalorder %s29, 4
      %s31 = scalar_select %p30, 0, %s29
      %s32 = sadd.s32 1, %s23
      %s33 = scalar_select %p30, %s32, %s23
      %p34 = scmp.ge.s32.totalorder %s33, 2
      %s35 = scalar_select %p34, 0, %s33
      %s36 = ssub.s32 %s23, %s35
      %s37 = ssub.s32 %s24, %s31
      %s38 = sor.u32 %s36, %s37
      %p39 = scmp.eq.s32.totalorder %s38, 0
      %s41 = sadd.s32 %s40, 1
      %s42 = scalar_select %p39, %s40, %s41
      %p45 = pneg %p39
      %p46 = scmp.eq.s32.totalorder %s16, 7
      %p47 = por %p45, %p46
      %p48 = scmp.ne.s32.totalorder %s40, %s43
      %p49 = scmp.eq.s32.totalorder %s16, 0
      %p50 = por %p48, %p49
      %p51 = scmp.ne.s32.totalorder %s40, %s43
      %p52 = scmp.eq.s32.totalorder %s21, 7
      %p53 = por %p51, %p52
      %p54 = scmp.ne.s32.totalorder %s43, %s44
      %p55 = scmp.eq.s32.totalorder %s21, 0
      %p56 = por %p54, %p55
      %p57 = scmp.ne.s32.totalorder %s43, %s44
      %p58 = scmp.eq.s32.totalorder %s22, 7
      %p59 = por %p57, %p58
      %p61 = scmp.ne.s32.totalorder %s44, %s60
      %p62 = scmp.eq.s32.totalorder %s22, 0
      %p63 = por %p61, %p62
      %s64 = ssub.s32 %s23, %s35
      %s65 = ssub.s32 %s24, %s31
      %s66 = sor.u32 %s64, %s65
      %p67 = scmp.eq.s32.totalorder %s66, 0
      %s69 = sadd.s32 %s68, 1
      %s70 = scalar_select %p67, %s68, %s69
      %p73 = pneg %p67
      %p74 = scmp.eq.s32.totalorder %s16, 7
      %p75 = por %p73, %p74
      %p76 = scmp.ne.s32.totalorder %s68, %s71
      %p77 = scmp.eq.s32.totalorder %s16, 0
      %p78 = por %p76, %p77
      %p79 = scmp.ne.s32.totalorder %s68, %s71
      %p80 = scmp.eq.s32.totalorder %s21, 7
      %p81 = por %p79, %p80
      %p82 = scmp.ne.s32.totalorder %s71, %s72
      %p83 = scmp.eq.s32.totalorder %s21, 0
      %p84 = por %p82, %p83
      %p85 = scmp.ne.s32.totalorder %s71, %s72
      %p86 = scmp.eq.s32.totalorder %s22, 7
      %p87 = por %p85, %p86
      %p89 = scmp.ne.s32.totalorder %s72, %s88
      %p90 = scmp.eq.s32.totalorder %s22, 0
      %p91 = por %p89, %p90
      %s93 = sadd.s32 %s92, 1
      %p96 = scmp.eq.s32.totalorder %s16, 7
      %p97 = scmp.ne.s32.totalorder %s92, %s94
      %p98 = scmp.eq.s32.totalorder %s16, 0
      %p99 = por %p97, %p98
      %p100 = scmp.ne.s32.totalorder %s92, %s94
      %p101 = scmp.eq.s32.totalorder %s21, 7
      %p102 = por %p100, %p101
      %p103 = scmp.ne.s32.totalorder %s94, %s95
      %p104 = scmp.eq.s32.totalorder %s21, 0
      %p105 = por %p103, %p104
      %p106 = scmp.ne.s32.totalorder %s94, %s95
      %p107 = scmp.eq.s32.totalorder %s22, 7
      %p108 = por %p106, %p107
      %p110 = scmp.ne.s32.totalorder %s95, %s109
      %p111 = scmp.eq.s32.totalorder %s22, 0
      %p112 = por %p110, %p111
      %s114 = sadd.s32 %s113, 1
      %p117 = scmp.eq.s32.totalorder %s16, 7
      %p118 = scmp.ne.s32.totalorder %s113, %s115
      %p119 = scmp.eq.s32.totalorder %s16, 0
      %p120 = por %p118, %p119
      %p121 = scmp.ne.s32.totalorder %s113, %s115
      %p122 = scmp.eq.s32.totalorder %s21, 7
      %p123 = por %p121, %p122
      %p124 = scmp.ne.s32.totalorder %s115, %s116
      %p125 = scmp.eq.s32.totalorder %s21, 0
      %p126 = por %p124, %p125
      %p127 = scmp.ne.s32.totalorder %s115, %s116
      %p128 = scmp.eq.s32.totalorder %s22, 7
      %p129 = por %p127, %p128
      %p131 = scmp.ne.s32.totalorder %s116, %s130
      %p132 = scmp.eq.s32.totalorder %s22, 0
      %p133 = por %p131, %p132
      %s135 = sadd.s32 %s134, 1
      %p138 = scmp.eq.s32.totalorder %s16, 7
      %p139 = scmp.ne.s32.totalorder %s134, %s136
      %p140 = scmp.eq.s32.totalorder %s16, 0
      %p141 = por %p139, %p140
      %p142 = scmp.ne.s32.totalorder %s134, %s136
      %p143 = scmp.eq.s32.totalorder %s21, 7
      %p144 = por %p142, %p143
      %p145 = scmp.ne.s32.totalorder %s136, %s137
      %p146 = scmp.eq.s32.totalorder %s21, 0
      %p147 = por %p145, %p146
      %p148 = scmp.ne.s32.totalorder %s136, %s137
      %p149 = scmp.eq.s32.totalorder %s22, 7
      %p150 = por %p148, %p149
      %p152 = scmp.ne.s32.totalorder %s137, %s151
      %p153 = scmp.eq.s32.totalorder %s22, 0
      %p154 = por %p152, %p153
      %s156 = sadd.s32 %s155, 1
      %p159 = scmp.eq.s32.totalorder %s16, 7
      %p160 = scmp.ne.s32.totalorder %s155, %s157
      %p161 = scmp.eq.s32.totalorder %s16, 0
      %p162 = por %p160, %p161
      %p163 = scmp.ne.s32.totalorder %s155, %s157
      %p164 = scmp.eq.s32.totalorder %s21, 7
      %p165 = por %p163, %p164
      %p166 = scmp.ne.s32.totalorder %s157, %s158
      %p167 = scmp.eq.s32.totalorder %s21, 0
      %p168 = por %p166, %p167
      %p169 = scmp.ne.s32.totalorder %s157, %s158
      %p170 = scmp.eq.s32.totalorder %s22, 7
      %p171 = por %p169, %p170
      %p173 = scmp.ne.s32.totalorder %s158, %s172
      %p174 = scmp.eq.s32.totalorder %s22, 0
      %p175 = por %p173, %p174
      %s176 = ssub.s32 %s23, %s35
      %p177 = scmp.eq.s32.totalorder %s176, 0
      %s179 = sadd.s32 %s178, 1
      %s180 = scalar_select %p177, %s178, %s179
      %p183 = pneg %p177
      %p184 = scmp.eq.s32.totalorder %s16, 7
      %p185 = por %p183, %p184
      %p186 = scmp.ne.s32.totalorder %s178, %s181
      %p187 = scmp.eq.s32.totalorder %s16, 0
      %p188 = por %p186, %p187
      %p189 = scmp.ne.s32.totalorder %s178, %s181
      %p190 = scmp.eq.s32.totalorder %s21, 7
      %p191 = por %p189, %p190
      %p192 = scmp.ne.s32.totalorder %s181, %s182
      %p193 = scmp.eq.s32.totalorder %s21, 0
      %p194 = por %p192, %p193
      %p195 = scmp.ne.s32.totalorder %s181, %s182
      %p196 = scmp.eq.s32.totalorder %s22, 7
      %p197 = por %p195, %p196
      %p199 = scmp.ne.s32.totalorder %s182, %s198
      %p200 = scmp.eq.s32.totalorder %s22, 0
      %p201 = por %p199, %p200
      %s202 = ssub.s32 %s23, %s35
      %p203 = scmp.eq.s32.totalorder %s202, 0
      %s205 = sadd.s32 %s204, 1
      %s206 = scalar_select %p203, %s204, %s205
      %p209 = pneg %p203
      %p210 = scmp.eq.s32.totalorder %s16, 7
      %p211 = por %p209, %p210
      %p212 = scmp.ne.s32.totalorder %s204, %s207
      %p213 = scmp.eq.s32.totalorder %s16, 0
      %p214 = por %p212, %p213
      %p215 = scmp.ne.s32.totalorder %s204, %s207
      %p216 = scmp.eq.s32.totalorder %s21, 7
      %p217 = por %p215, %p216
      %p218 = scmp.ne.s32.totalorder %s207, %s208
      %p219 = scmp.eq.s32.totalorder %s21, 0
      %p220 = por %p218, %p219
      %p221 = scmp.ne.s32.totalorder %s207, %s208
      %p222 = scmp.eq.s32.totalorder %s22, 7
      %p223 = por %p221, %p222
      %p225 = scmp.ne.s32.totalorder %s208, %s224
      %p226 = scmp.eq.s32.totalorder %s22, 0
      %p227 = por %p225, %p226
      %p228 = scmp.le.s32.totalorder 1, %s16
      %p229 = scmp.lt.s32.totalorder %s16, 9
      %p230 = pnand %p228, %p229
      %p231 = pneg %p230
      // Predicated region
      $region9: #{attention_layer_3d.1} parent=5 // pred_check
        _
      $region10: #{attention_layer_3d.1} parent=5 // pred_check_branch
        %233 = sbr.rel (%p230) target = $region12
      $region11: #{attention_layer_3d.1} parent=5 // pred_region
        %s234 = ssub.s32 %s16, 1
        // Predicated region
        $region13: #{attention_layer_3d.1} parent=11 // pred_check
          %p235 = pneg %p105
        $region14: #{attention_layer_3d.1} parent=11 // pred_check_branch
          %237 = sbr.rel (%p235) target = $region16
        $region15: #{attention_layer_3d.1} parent=11 // pred_region
          _
        $region16: #{attention_layer_3d.1} parent=11 // pred_fallthru
          _
        // Predicated region
        $region17: #{attention_layer_3d.1} parent=11 // pred_check
          %p238 = pneg %p126
        $region18: #{attention_layer_3d.1} parent=11 // pred_check_branch
          %240 = sbr.rel (%p238) target = $region20
        $region19: #{attention_layer_3d.1} parent=11 // pred_region
          _
        $region20: #{attention_layer_3d.1} parent=11 // pred_fallthru
          _
        // Predicated region
        $region21: #{attention_layer_3d.1} parent=11 // pred_check
          %p241 = pneg %p147
        $region22: #{attention_layer_3d.1} parent=11 // pred_check_branch
          %243 = sbr.rel (%p241) target = $region24
        $region23: #{attention_layer_3d.1} parent=11 // pred_region
          _
        $region24: #{attention_layer_3d.1} parent=11 // pred_fallthru
          _
        // Predicated region
        $region25: #{attention_layer_3d.1} parent=11 // pred_check
          %p244 = pneg %p168
        $region26: #{attention_layer_3d.1} parent=11 // pred_check_branch
          %246 = sbr.rel (%p244) target = $region28
        $region27: #{attention_layer_3d.1} parent=11 // pred_region
          _
        $region28: #{attention_layer_3d.1} parent=11 // pred_fallthru
          _
      $region12: #{attention_layer_3d.1} parent=5 // pred_fallthru
        _
      %p247 = scmp.lt.s32.totalorder %s16, 8
      // Predicated region
      $region29: #{attention_layer_3d.1} parent=5 // pred_check
        %p248 = pneg %p247
      $region30: #{attention_layer_3d.1} parent=5 // pred_check_branch
        %250 = sbr.rel (%p248) target = $region32
      $region31: #{attention_layer_3d.1} parent=5 // pred_region
        // Predicated region
        $region33: #{attention_layer_3d.1} parent=31 // pred_check
          %p251 = pneg %p50
        $region34: #{attention_layer_3d.1} parent=31 // pred_check_branch
          %253 = sbr.rel (%p251) target = $region36
        $region35: #{attention_layer_3d.1} parent=31 // pred_region
          %s254 = smul.u32 8, %s24
          %p255 = scmp.lt.s32.totalorder %s23, 1
          %s256 = scalar_select %p255, %s23, 1
          %p257 = scmp.lt.s32.totalorder %s254, 31
          %s258 = scalar_select %p257, %s254, 31
          %s259 = smul.addr %s256, 32
          %s260 = sadd.s32 %s258, %s259
          %s261 = smul.addr %s260, 4
          %s262 = scalar_lea.vmem %s0, %s261
          %s263 = smul.u32 8, %s24
        $region36: #{attention_layer_3d.1} parent=31 // pred_fallthru
          _
        // Predicated region
        $region37: #{attention_layer_3d.1} parent=31 // pred_check
          %p264 = pneg %p78
        $region38: #{attention_layer_3d.1} parent=31 // pred_check_branch
          %266 = sbr.rel (%p264) target = $region40
        $region39: #{attention_layer_3d.1} parent=31 // pred_region
          %s267 = sand.u32 %s68, 1
          %s268 = sand.u32 %s68, 1
          %s269 = smul.addr %s268, 64
          %s270 = scalar_lea.vmem [#allocation6], %s269
          %s271 = smul.u32 8, %s24
          %s272 = smul.addr %s23, 64
          %s273 = sadd.s32 %s271, %s272
          %s274 = smul.addr %s273, 4
          %s275 = scalar_lea.vmem %s1, %s274
          // Predicated region
          $region41: #{attention_layer_3d.1} parent=39 // pred_check
            _
          $region42: #{attention_layer_3d.1} parent=39 // pred_check_branch
            %277 = sbr.rel (0) target = $region44
          $region43: #{attention_layer_3d.1} parent=39 // pred_region
            // Predicated region
            $region45: #{attention_layer_3d.1} parent=43 // pred_check
              _
            $region46: #{attention_layer_3d.1} parent=43 // pred_check_branch
              %279 = sbr.rel (0) target = $region48
            $region47: #{attention_layer_3d.1} parent=43 // pred_region
              loop: start=0, step=1, limit=1
              $region49: #{attention_layer_3d.1} parent=47 // loop_pre_header
                _
              $region50: #{attention_layer_3d.1} parent=47 // loop_header
                %s281 = sphi 0, %s285
                %p282 = scmp.ge.s32.totalorder %s281, 1
                %s286 = sphi %s275, %s275
                %s287 = sphi %s270, %s270
              $region51: #{attention_layer_3d.1} parent=47 // loop_header_branch
                %284 = sbr.rel (%p282) target = $region55
              $region52: #{attention_layer_3d.1} parent=47 // loop_body
                %v288 = vld [vmem:[%s286] sm:$0xff]
                %289 = vst [vmem:[%s287] sm:$0xff] %v288
                %v290 = vld [vmem:[%s286 + $0x8] sm:$0xff]
                %291 = vst [vmem:[%s287 + $0x8] sm:$0xff] %v290
                %v292 = vld [vmem:[%s286 + $0x10] sm:$0xff]
                %293 = vst [vmem:[%s287 + $0x10] sm:$0xff] %v292
                %v294 = vld [vmem:[%s286 + $0x18] sm:$0xff]
                %295 = vst [vmem:[%s287 + $0x18] sm:$0xff] %v294
                %v296 = vld [vmem:[%s286 + $0x80] sm:$0xff]
                %297 = vst [vmem:[%s287 + $0x20] sm:$0xff] %v296
                %v298 = vld [vmem:[%s286 + $0x88] sm:$0xff]
                %299 = vst [vmem:[%s287 + $0x28] sm:$0xff] %v298
                %v300 = vld [vmem:[%s286 + $0x90] sm:$0xff]
                %301 = vst [vmem:[%s287 + $0x30] sm:$0xff] %v300
                %v302 = vld [vmem:[%s286 + $0x98] sm:$0xff]
                %303 = vst [vmem:[%s287 + $0x38] sm:$0xff] %v302
              $region53: #{attention_layer_3d.1} parent=47 // loop_footer
                %s285 = sadd.s32 1, %s281
              $region54: #{attention_layer_3d.1} parent=47 // loop_footer_branch
                %280 = sbr.rel target = $region50
              $region55: #{attention_layer_3d.1} parent=47 // loop_exit
                _
            $region48: #{attention_layer_3d.1} parent=43 // pred_fallthru
              _
            // Predicated region
            $region56: #{attention_layer_3d.1} parent=43 // pred_check
              _
            $region57: #{attention_layer_3d.1} parent=43 // pred_check_branch
              %305 = sbr.rel target = $region59
            $region58: #{attention_layer_3d.1} parent=43 // pred_region
              _
            $region59: #{attention_layer_3d.1} parent=43 // pred_fallthru
              _
          $region44: #{attention_layer_3d.1} parent=39 // pred_fallthru
            _
          %306 = vnop
        $region40: #{attention_layer_3d.1} parent=31 // pred_fallthru
          _
      $region32: #{attention_layer_3d.1} parent=5 // pred_fallthru
        _
      %p307 = scmp.le.s32.totalorder 1, %s16
      %p308 = scmp.lt.s32.totalorder %s16, 9
      %p309 = pnand %p307, %p308
      %p310 = pneg %p309
      // Predicated region
      $region60: #{attention_layer_3d.1} parent=5 // pred_check
        _
      $region61: #{attention_layer_3d.1} parent=5 // pred_check_branch
        %312 = sbr.rel (%p309) target = $region63
      $region62: #{attention_layer_3d.1} parent=5 // pred_region
        %s313 = ssub.s32 %s16, 1
        %s314 = sand.u32 %s71, 1
        %s315 = sand.u32 %s71, 1
        %s316 = smul.addr %s315, 64
        %s317 = scalar_lea.vmem [#allocation6], %s316
        // Predicated region
        $region64: #{attention_layer_3d.1} parent=62 // pred_check
          %p318 = pneg %p84
        $region65: #{attention_layer_3d.1} parent=62 // pred_check_branch
          %320 = sbr.rel (%p318) target = $region67
        $region66: #{attention_layer_3d.1} parent=62 // pred_region
          _
        $region67: #{attention_layer_3d.1} parent=62 // pred_fallthru
          _
        %s321 = smul.u32 8, %s26
        %p322 = scmp.lt.s32.totalorder %s25, 1
        %s323 = scalar_select %p322, %s25, 1
        %p324 = scmp.lt.s32.totalorder %s321, 31
        %s325 = scalar_select %p324, %s321, 31
        %s326 = smul.addr %s323, 32
        %s327 = sadd.s32 %s325, %s326
        %s328 = smul.addr %s327, 4
        %s329 = scalar_lea.vmem %s0, %s328
        %p330 = pneg %p56
        %p331 = pneg %p53
        %s332 = sand.u32 %s71, 1
        %s333 = sand.u32 %s71, 1
        %s334 = smul.addr %s333, 64
        %s335 = scalar_lea.vmem [#allocation6], %s334
        %p336 = pneg %p84
        %p337 = pneg %p81
        %p338 = pneg %p105
        %p339 = pneg %p102
        %p340 = pneg %p126
        %p341 = pneg %p123
        %p342 = pneg %p147
        %p343 = pneg %p144
        %p344 = pneg %p168
        %p345 = pneg %p165
        %p346 = pneg %p194
        %p347 = pneg %p191
        %p348 = scmp.lt.s32.totalorder %s25, 1
        %s349 = scalar_select %p348, %s25, 1
        %s350 = smul.addr %s349, 8
        %s351 = smul.addr %s350, 4
        %s352 = scalar_lea.vmem %s6, %s351
        %p353 = pneg %p220
        %p354 = pneg %p217
        %p355 = scmp.lt.s32.totalorder %s25, 1
        %s356 = scalar_select %p355, %s25, 1
        %s357 = smul.addr %s356, 8
        %s358 = scalar_lea.vmem %s7, %s357
        %s359 = smul.u32 8, %s26
        %p360 = scmp.lt.s32.totalorder %s25, 1
        %s361 = scalar_select %p360, %s25, 1
        %p362 = scmp.lt.s32.totalorder %s359, 31
        %s363 = scalar_select %p362, %s359, 31
        %s364 = smul.addr %s361, 32
        %s365 = sadd.s32 %s363, %s364
        %s366 = smul.addr %s365, 4
        %s367 = scalar_lea.vmem %s0, %s366
        %s368 = smul.u32 8, %s26
        %s369 = smul.u32 8, %s26
        %p370 = scmp.lt.s32.totalorder %s25, 1
        %s371 = scalar_select %p370, %s25, 1
        %s372 = smul.addr %s371, 8
        %s373 = smul.addr %s372, 4
        %s374 = scalar_lea.vmem %s6, %s373
        %p375 = scmp.lt.s32.totalorder %s25, 1
        %s376 = scalar_select %p375, %s25, 1
        %s377 = smul.addr %s376, 8
        %s378 = scalar_lea.vmem %s7, %s377
        %p380 = scmp.eq.s32.totalorder %s26, 0
        // Predicated region
        $region68: #{attention_layer_3d.1} parent=62 // pred_check
          %p381 = pneg %p380
        $region69: #{attention_layer_3d.1} parent=62 // pred_check_branch
          %383 = sbr.rel (%p381) target = $region71
        $region70: #{attention_layer_3d.1} parent=62 // pred_region
          %vm384 = vcmask 0
          %385 = vst.msk [vmem:[#allocation2] sm:$0x1] %vm384, -inf
          %386 = vst.msk [vmem:[#allocation3] sm:$0x1] %vm384, 0.0
          %vm387 = vcmask 7168
          %388 = vst.msk [vmem:[#allocation4] sm:$0xff] %vm387, 0.0
        $region71: #{attention_layer_3d.1} parent=62 // pred_fallthru
          _
        %v389 = vld [vmem:[%s367] sm:$0xff]
        %v390 = vld [vmem:[%s367 + $0x8] sm:$0xff]
        %v391 = vld [vmem:[%s367 + $0x10] sm:$0xff]
        %v392 = vld [vmem:[%s367 + $0x18] sm:$0xff]
        %v393 = vunpack.c.l.bf16 %v389
        %v394 = vunpack.c.h.bf16 %v389
        %v395 = vunpack.c.l.bf16 %v390
        %v396 = vunpack.c.h.bf16 %v390
        %v397 = vunpack.c.l.bf16 %v391
        %v398 = vunpack.c.h.bf16 %v391
        %v399 = vunpack.c.l.bf16 %v392
        %v400 = vunpack.c.h.bf16 %v392
        %v401 = vld [vmem:[%s317] sm:$0xff]
        %v402 = vld [vmem:[%s317 + $0x8] sm:$0xff]
        %v403 = vld [vmem:[%s317 + $0x10] sm:$0xff]
        %v404 = vld [vmem:[%s317 + $0x18] sm:$0xff]
        %v405 = vld [vmem:[%s317 + $0x20] sm:$0xff]
        %v406 = vld [vmem:[%s317 + $0x28] sm:$0xff]
        %v407 = vld [vmem:[%s317 + $0x30] sm:$0xff]
        %v408 = vld [vmem:[%s317 + $0x38] sm:$0xff]
        %v409 = vunpack.c.l.bf16 %v401
        %v410 = vunpack.c.h.bf16 %v401
        %v411 = vunpack.c.l.bf16 %v402
        %v412 = vunpack.c.h.bf16 %v402
        %v413 = vunpack.c.l.bf16 %v403
        %v414 = vunpack.c.h.bf16 %v403
        %v415 = vunpack.c.l.bf16 %v404
        %v416 = vunpack.c.h.bf16 %v404
        %v417 = vunpack.c.l.bf16 %v405
        %v418 = vunpack.c.h.bf16 %v405
        %v419 = vunpack.c.l.bf16 %v406
        %v420 = vunpack.c.h.bf16 %v406
        %v421 = vunpack.c.l.bf16 %v407
        %v422 = vunpack.c.h.bf16 %v407
        %v423 = vunpack.c.l.bf16 %v408
        %v424 = vunpack.c.h.bf16 %v408
        %v425 = vld [vmem:[%s2] sm:$0xf]
        %v426 = vld [vmem:[%s2 + $0x4] sm:$0xf]
        %v427 = vld [vmem:[%s3] sm:$0xff]
        %v428 = vld [vmem:[%s3 + $0x8] sm:$0xff]
        %430 = vset.pattern.permute.xlu0 0
        %431 = vperm.xlu0 %430, %v427
        %v432 = vpop.permute.xlu0 %431
        %435 = vset.pattern.permute.xlu0 0
        %436 = vperm.xlu0 %435, %v428
        %v437 = vpop.permute.xlu0 %436
        %v441 = vunpack.c.l.b16 %v425
        %v442 = vunpack.c.l.b16 %v426
        %v443 = vpack.c.b16 %v442, %v441
        %v448 = vunpack.c.l.b16 %v389
        %v449 = vunpack.c.h.b16 %v389
        %v450 = vunpack.c.l.b16 %v390
        %v451 = vunpack.c.h.b16 %v390
        %v452 = vunpack.c.l.b16 %v391
        %v453 = vunpack.c.h.b16 %v391
        %v454 = vunpack.c.l.b16 %v392
        %v455 = vunpack.c.h.b16 %v392
        %v456 = vpack.c.b16 %v448, %v448
        %v457 = vpack.c.b16 %v449, %v449
        %v458 = vpack.c.b16 %v450, %v450
        %v459 = vpack.c.b16 %v451, %v451
        %v460 = vpack.c.b16 %v452, %v452
        %v461 = vpack.c.b16 %v453, %v453
        %v462 = vpack.c.b16 %v454, %v454
        %v463 = vpack.c.b16 %v455, %v455
        %vm464 = vcmask 64512
        %v466 = vsel %vm464, %v443, 0
        %vm468 = vcmask 1043456
        %v470 = vsel %vm468, %v456, 0
        %v473 = vsel %vm468, %v457, 0
        %v476 = vsel %vm468, %v458, 0
        %v479 = vsel %vm468, %v459, 0
        %v482 = vsel %vm468, %v460, 0
        %v485 = vsel %vm468, %v461, 0
        %v488 = vsel %vm468, %v462, 0
        %v491 = vsel %vm468, %v463, 0
        %493 = vmatprep.subr.bf16.mxu0 %v473
        %494 = vmatpush1.bf16.msra.mxu0 %v470
        %495 = vmatprep.subr.bf16.mxu0 0
        %496 = vmatpush1.bf16.msra.mxu0 0
        %497 = vmatprep.subr.bf16.mxu0 0
        %498 = vmatpush1.bf16.msra.mxu0 0
        %499 = vmatprep.subr.bf16.mxu0 0
        %500 = vmatpush1.bf16.msra.mxu0 0
        %501 = vmatprep.subr.bf16.mxu0 0
        %502 = vmatpush1.bf16.msra.mxu0 0
        %503 = vmatprep.subr.bf16.mxu0 0
        %504 = vmatpush1.bf16.msra.mxu0 0
        %505 = vmatprep.subr.bf16.mxu0 0
        %506 = vmatpush1.bf16.msra.mxu0 0
        %507 = vmatprep.subr.bf16.mxu0 0
        %508 = vmatpush1.bf16.msra.mxu0 0
        %509 = vmatprep.subr.bf16.mxu0 0
        %510 = vmatpush1.bf16.msra.mxu0 0
        %511 = vmatprep.subr.bf16.mxu0 0
        %512 = vmatpush1.bf16.msra.mxu0 0
        %513 = vmatprep.subr.bf16.mxu0 0
        %514 = vmatpush1.bf16.msra.mxu0 0
        %515 = vmatprep.subr.bf16.mxu0 0
        %516 = vmatpush1.bf16.msra.mxu0 0
        %517 = vmatprep.subr.bf16.mxu0 0
        %518 = vmatpush1.bf16.msra.mxu0 0
        %519 = vmatprep.subr.bf16.mxu0 0
        %520 = vmatpush1.bf16.msra.mxu0 0
        %521 = vmatprep.subr.bf16.mxu0 0
        %522 = vmatpush1.bf16.msra.mxu0 0
        %523 = vmatprep.subr.bf16.mxu0 0
        %524 = vmatpush1.bf16.msra.mxu0 0
        %525 = vmatprep.mubr.bf16.mxu0 0
        %526 = vmatmul.mubr.bf16.gmra.mrb[0].mxu0 %v466
        %v527 = vpop.f32.mrb[0].mxu0
        %v528 = vadd.f32 %v432, %v527
        %v529 = vpop.f32.mrb[0].mxu0
        %v530 = vadd.f32 %v432, %v529
        %v531 = vpop.f32.mrb[0].mxu0
        %v532 = vadd.f32 %v437, %v531
        %v533 = vpop.f32.mrb[0].mxu0
        %v534 = vadd.f32 %v437, %v533
        %535 = vdwg.mxu0
        %536 = vmatprep.subr.bf16.mxu0 %v479
        %537 = vmatpush1.bf16.msra.mxu0 %v476
        %538 = vmatprep.subr.bf16.mxu0 0
        %539 = vmatpush1.bf16.msra.mxu0 0
        %540 = vmatprep.subr.bf16.mxu0 0
        %541 = vmatpush1.bf16.msra.mxu0 0
        %542 = vmatprep.subr.bf16.mxu0 0
        %543 = vmatpush1.bf16.msra.mxu0 0
        %544 = vmatprep.subr.bf16.mxu0 0
        %545 = vmatpush1.bf16.msra.mxu0 0
        %546 = vmatprep.subr.bf16.mxu0 0
        %547 = vmatpush1.bf16.msra.mxu0 0
        %548 = vmatprep.subr.bf16.mxu0 0
        %549 = vmatpush1.bf16.msra.mxu0 0
        %550 = vmatprep.subr.bf16.mxu0 0
        %551 = vmatpush1.bf16.msra.mxu0 0
        %552 = vmatprep.subr.bf16.mxu0 0
        %553 = vmatpush1.bf16.msra.mxu0 0
        %554 = vmatprep.subr.bf16.mxu0 0
        %555 = vmatpush1.bf16.msra.mxu0 0
        %556 = vmatprep.subr.bf16.mxu0 0
        %557 = vmatpush1.bf16.msra.mxu0 0
        %558 = vmatprep.subr.bf16.mxu0 0
        %559 = vmatpush1.bf16.msra.mxu0 0
        %560 = vmatprep.subr.bf16.mxu0 0
        %561 = vmatpush1.bf16.msra.mxu0 0
        %562 = vmatprep.subr.bf16.mxu0 0
        %563 = vmatpush1.bf16.msra.mxu0 0
        %564 = vmatprep.subr.bf16.mxu0 0
        %565 = vmatpush1.bf16.msra.mxu0 0
        %566 = vmatprep.subr.bf16.mxu0 0
        %567 = vmatpush1.bf16.msra.mxu0 0
        %568 = vmatprep.mubr.bf16.mxu0 0
        %569 = vmatmul.mubr.bf16.gmra.mrb[0].mxu0 %v466
        %v570 = vpop.f32.mrb[0].mxu0
        %v571 = vadd.f32 %v432, %v570
        %v572 = vpop.f32.mrb[0].mxu0
        %v573 = vadd.f32 %v432, %v572
        %v574 = vpop.f32.mrb[0].mxu0
        %v575 = vadd.f32 %v437, %v574
        %v576 = vpop.f32.mrb[0].mxu0
        %v577 = vadd.f32 %v437, %v576
        %578 = vdwg.mxu0
        %579 = vmatprep.subr.bf16.mxu0 %v485
        %580 = vmatpush1.bf16.msra.mxu0 %v482
        %581 = vmatprep.subr.bf16.mxu0 0
        %582 = vmatpush1.bf16.msra.mxu0 0
        %583 = vmatprep.subr.bf16.mxu0 0
        %584 = vmatpush1.bf16.msra.mxu0 0
        %585 = vmatprep.subr.bf16.mxu0 0
        %586 = vmatpush1.bf16.msra.mxu0 0
        %587 = vmatprep.subr.bf16.mxu0 0
        %588 = vmatpush1.bf16.msra.mxu0 0
        %589 = vmatprep.subr.bf16.mxu0 0
        %590 = vmatpush1.bf16.msra.mxu0 0
        %591 = vmatprep.subr.bf16.mxu0 0
        %592 = vmatpush1.bf16.msra.mxu0 0
        %593 = vmatprep.subr.bf16.mxu0 0
        %594 = vmatpush1.bf16.msra.mxu0 0
        %595 = vmatprep.subr.bf16.mxu0 0
        %596 = vmatpush1.bf16.msra.mxu0 0
        %597 = vmatprep.subr.bf16.mxu0 0
        %598 = vmatpush1.bf16.msra.mxu0 0
        %599 = vmatprep.subr.bf16.mxu0 0
        %600 = vmatpush1.bf16.msra.mxu0 0
        %601 = vmatprep.subr.bf16.mxu0 0
        %602 = vmatpush1.bf16.msra.mxu0 0
        %603 = vmatprep.subr.bf16.mxu0 0
        %604 = vmatpush1.bf16.msra.mxu0 0
        %605 = vmatprep.subr.bf16.mxu0 0
        %606 = vmatpush1.bf16.msra.mxu0 0
        %607 = vmatprep.subr.bf16.mxu0 0
        %608 = vmatpush1.bf16.msra.mxu0 0
        %609 = vmatprep.subr.bf16.mxu0 0
        %610 = vmatpush1.bf16.msra.mxu0 0
        %611 = vmatprep.mubr.bf16.mxu0 0
        %612 = vmatmul.mubr.bf16.gmra.mrb[0].mxu0 %v466
        %v613 = vpop.f32.mrb[0].mxu0
        %v614 = vadd.f32 %v432, %v613
        %v615 = vpop.f32.mrb[0].mxu0
        %v616 = vadd.f32 %v432, %v615
        %v617 = vpop.f32.mrb[0].mxu0
        %v618 = vadd.f32 %v437, %v617
        %v619 = vpop.f32.mrb[0].mxu0
        %v620 = vadd.f32 %v437, %v619
        %621 = vdwg.mxu0
        %622 = vmatprep.subr.bf16.mxu0 %v491
        %623 = vmatpush1.bf16.msra.mxu0 %v488
        %624 = vmatprep.subr.bf16.mxu0 0
        %625 = vmatpush1.bf16.msra.mxu0 0
        %626 = vmatprep.subr.bf16.mxu0 0
        %627 = vmatpush1.bf16.msra.mxu0 0
        %628 = vmatprep.subr.bf16.mxu0 0
        %629 = vmatpush1.bf16.msra.mxu0 0
        %630 = vmatprep.subr.bf16.mxu0 0
        %631 = vmatpush1.bf16.msra.mxu0 0
        %632 = vmatprep.subr.bf16.mxu0 0
        %633 = vmatpush1.bf16.msra.mxu0 0
        %634 = vmatprep.subr.bf16.mxu0 0
        %635 = vmatpush1.bf16.msra.mxu0 0
        %636 = vmatprep.subr.bf16.mxu0 0
        %637 = vmatpush1.bf16.msra.mxu0 0
        %638 = vmatprep.subr.bf16.mxu0 0
        %639 = vmatpush1.bf16.msra.mxu0 0
        %640 = vmatprep.subr.bf16.mxu0 0
        %641 = vmatpush1.bf16.msra.mxu0 0
        %642 = vmatprep.subr.bf16.mxu0 0
        %643 = vmatpush1.bf16.msra.mxu0 0
        %644 = vmatprep.subr.bf16.mxu0 0
        %645 = vmatpush1.bf16.msra.mxu0 0
        %646 = vmatprep.subr.bf16.mxu0 0
        %647 = vmatpush1.bf16.msra.mxu0 0
        %648 = vmatprep.subr.bf16.mxu0 0
        %649 = vmatpush1.bf16.msra.mxu0 0
        %650 = vmatprep.subr.bf16.mxu0 0
        %651 = vmatpush1.bf16.msra.mxu0 0
        %652 = vmatprep.subr.bf16.mxu0 0
        %653 = vmatpush1.bf16.msra.mxu0 0
        %654 = vmatprep.mubr.bf16.mxu0 0
        %655 = vmatmul.mubr.bf16.gmra.mrb[0].mxu0 %v466
        %v656 = vpop.f32.mrb[0].mxu0
        %v657 = vadd.f32 %v432, %v656
        %v658 = vpop.f32.mrb[0].mxu0
        %v659 = vadd.f32 %v432, %v658
        %v660 = vpop.f32.mrb[0].mxu0
        %v661 = vadd.f32 %v437, %v660
        %v662 = vpop.f32.mrb[0].mxu0
        %v663 = vadd.f32 %v437, %v662
        %664 = vdwg.mxu0
        %v665 = vadd.f32 %v528, %v409
        %v666 = vadd.f32 %v530, %v410
        %v667 = vadd.f32 %v571, %v411
        %v668 = vadd.f32 %v573, %v412
        %v669 = vadd.f32 %v614, %v413
        %v670 = vadd.f32 %v616, %v414
        %v671 = vadd.f32 %v657, %v415
        %v672 = vadd.f32 %v659, %v416
        %v673 = vadd.f32 %v532, %v417
        %v674 = vadd.f32 %v534, %v418
        %v675 = vadd.f32 %v575, %v419
        %v676 = vadd.f32 %v577, %v420
        %v677 = vadd.f32 %v618, %v421
        %v678 = vadd.f32 %v620, %v422
        %v679 = vadd.f32 %v661, %v423
        %v680 = vadd.f32 %v663, %v424
        %v681 = vmax.f32 %v665, 0.0
        %v682 = vmax.f32 %v666, 0.0
        %v683 = vmax.f32 %v667, 0.0
        %v684 = vmax.f32 %v668, 0.0
        %v685 = vmax.f32 %v669, 0.0
        %v686 = vmax.f32 %v670, 0.0
        %v687 = vmax.f32 %v671, 0.0
        %v688 = vmax.f32 %v672, 0.0
        %v689 = vmax.f32 %v673, 0.0
        %v690 = vmax.f32 %v674, 0.0
        %v691 = vmax.f32 %v675, 0.0
        %v692 = vmax.f32 %v676, 0.0
        %v693 = vmax.f32 %v677, 0.0
        %v694 = vmax.f32 %v678, 0.0
        %v695 = vmax.f32 %v679, 0.0
        %v696 = vmax.f32 %v680, 0.0
        %v697 = vld [vmem:[%s4] sm:$0x1]
        %v698 = vld [vmem:[#allocation5] sm:$0x1]
        %700 = vset.pattern.permute.xlu0 0
        %701 = vperm.xlu0 %700, %v698
        %v702 = vpop.permute.xlu0 %701
        %v704 = vlaneseq
        %v705 = vshrl.u32 %v704, 7
        %v706 = vsub.s32 0, %v705
        %v707 = vrot.slane %v702, %v706
        %vm708 = vcmask 130048
        %v710 = vsel %vm708, %v697, 0
        %712 = vmatprep.subr.mxu0 %v682
        %713 = vmatpush1.msra.mxu0 %v681
        %714 = vmatprep.subr.mxu0 %v690
        %715 = vmatpush1.msra.mxu0 %v689
        %716 = vmatprep.subr.mxu0 0.0
        %717 = vmatpush1.msra.mxu0 0.0
        %718 = vmatprep.subr.mxu0 0.0
        %719 = vmatpush1.msra.mxu0 0.0
        %720 = vmatprep.subr.mxu0 0.0
        %721 = vmatpush1.msra.mxu0 0.0
        %722 = vmatprep.subr.mxu0 0.0
        %723 = vmatpush1.msra.mxu0 0.0
        %724 = vmatprep.subr.mxu0 0.0
        %725 = vmatpush1.msra.mxu0 0.0
        %726 = vmatprep.subr.mxu0 0.0
        %727 = vmatpush1.msra.mxu0 0.0
        %728 = vmatprep.subr.mxu0 0.0
        %729 = vmatpush1.msra.mxu0 0.0
        %730 = vmatprep.subr.mxu0 0.0
        %731 = vmatpush1.msra.mxu0 0.0
        %732 = vmatprep.subr.mxu0 0.0
        %733 = vmatpush1.msra.mxu0 0.0
        %734 = vmatprep.subr.mxu0 0.0
        %735 = vmatpush1.msra.mxu0 0.0
        %736 = vmatprep.subr.mxu0 0.0
        %737 = vmatpush1.msra.mxu0 0.0
        %738 = vmatprep.subr.mxu0 0.0
        %739 = vmatpush1.msra.mxu0 0.0
        %740 = vmatprep.subr.mxu0 0.0
        %741 = vmatpush1.msra.mxu0 0.0
        %742 = vmatprep.subr.mxu0 0.0
        %743 = vmatpush1.msra.mxu0 0.0
        %744 = vmatprep.subr.mxu0 0.0
        %745 = vmatpush1.msra.mxu0 0.0
        %746 = vmatprep.subr.mxu0 0.0
        %747 = vmatpush1.msra.mxu0 0.0
        %748 = vmatprep.subr.mxu0 0.0
        %749 = vmatpush1.msra.mxu0 0.0
        %750 = vmatprep.subr.mxu0 0.0
        %751 = vmatpush1.msra.mxu0 0.0
        %752 = vmatprep.subr.mxu0 0.0
        %753 = vmatpush1.msra.mxu0 0.0
        %754 = vmatprep.subr.mxu0 0.0
        %755 = vmatpush1.msra.mxu0 0.0
        %756 = vmatprep.subr.mxu0 0.0
        %757 = vmatpush1.msra.mxu0 0.0
        %758 = vmatprep.subr.mxu0 0.0
        %759 = vmatpush1.msra.mxu0 0.0
        %760 = vmatprep.subr.mxu0 0.0
        %761 = vmatpush1.msra.mxu0 0.0
        %762 = vmatprep.subr.mxu0 0.0
        %763 = vmatpush1.msra.mxu0 0.0
        %764 = vmatprep.subr.mxu0 0.0
        %765 = vmatpush1.msra.mxu0 0.0
        %766 = vmatprep.subr.mxu0 0.0
        %767 = vmatpush1.msra.mxu0 0.0
        %768 = vmatprep.subr.mxu0 0.0
        %769 = vmatpush1.msra.mxu0 0.0
        %770 = vmatprep.subr.mxu0 0.0
        %771 = vmatpush1.msra.mxu0 0.0
        %772 = vmatprep.subr.mxu0 0.0
        %773 = vmatpush1.msra.mxu0 0.0
        %774 = vmatprep.subr.mxu0 0.0
        %775 = vmatpush1.msra.mxu0 0.0
        %776 = vmatprep.mubr.f32.mxu0 0.0
        %777 = vmatmul.mubr.f32.gmra.mrb[0].mxu0 %v710
        %v778 = vpop.f32.mrb[0].mxu0
        %v779 = vadd.f32 %v707, %v778
        %v780 = vpop.f32.mrb[0].mxu0
        %v781 = vadd.f32 %v707, %v780
        %782 = vdwg.mxu0
        %783 = vmatprep.subr.mxu0 %v684
        %784 = vmatpush1.msra.mxu0 %v683
        %785 = vmatprep.subr.mxu0 %v692
        %786 = vmatpush1.msra.mxu0 %v691
        %787 = vmatprep.subr.mxu0 0.0
        %788 = vmatpush1.msra.mxu0 0.0
        %789 = vmatprep.subr.mxu0 0.0
        %790 = vmatpush1.msra.mxu0 0.0
        %791 = vmatprep.subr.mxu0 0.0
        %792 = vmatpush1.msra.mxu0 0.0
        %793 = vmatprep.subr.mxu0 0.0
        %794 = vmatpush1.msra.mxu0 0.0
        %795 = vmatprep.subr.mxu0 0.0
        %796 = vmatpush1.msra.mxu0 0.0
        %797 = vmatprep.subr.mxu0 0.0
        %798 = vmatpush1.msra.mxu0 0.0
        %799 = vmatprep.subr.mxu0 0.0
        %800 = vmatpush1.msra.mxu0 0.0
        %801 = vmatprep.subr.mxu0 0.0
        %802 = vmatpush1.msra.mxu0 0.0
        %803 = vmatprep.subr.mxu0 0.0
        %804 = vmatpush1.msra.mxu0 0.0
        %805 = vmatprep.subr.mxu0 0.0
        %806 = vmatpush1.msra.mxu0 0.0
        %807 = vmatprep.subr.mxu0 0.0
        %808 = vmatpush1.msra.mxu0 0.0
        %809 = vmatprep.subr.mxu0 0.0
        %810 = vmatpush1.msra.mxu0 0.0
        %811 = vmatprep.subr.mxu0 0.0
        %812 = vmatpush1.msra.mxu0 0.0
        %813 = vmatprep.subr.mxu0 0.0
        %814 = vmatpush1.msra.mxu0 0.0
        %815 = vmatprep.subr.mxu0 0.0
        %816 = vmatpush1.msra.mxu0 0.0
        %817 = vmatprep.subr.mxu0 0.0
        %818 = vmatpush1.msra.mxu0 0.0
        %819 = vmatprep.subr.mxu0 0.0
        %820 = vmatpush1.msra.mxu0 0.0
        %821 = vmatprep.subr.mxu0 0.0
        %822 = vmatpush1.msra.mxu0 0.0
        %823 = vmatprep.subr.mxu0 0.0
        %824 = vmatpush1.msra.mxu0 0.0
        %825 = vmatprep.subr.mxu0 0.0
        %826 = vmatpush1.msra.mxu0 0.0
        %827 = vmatprep.subr.mxu0 0.0
        %828 = vmatpush1.msra.mxu0 0.0
        %829 = vmatprep.subr.mxu0 0.0
        %830 = vmatpush1.msra.mxu0 0.0
        %831 = vmatprep.subr.mxu0 0.0
        %832 = vmatpush1.msra.mxu0 0.0
        %833 = vmatprep.subr.mxu0 0.0
        %834 = vmatpush1.msra.mxu0 0.0
        %835 = vmatprep.subr.mxu0 0.0
        %836 = vmatpush1.msra.mxu0 0.0
        %837 = vmatprep.subr.mxu0 0.0
        %838 = vmatpush1.msra.mxu0 0.0
        %839 = vmatprep.subr.mxu0 0.0
        %840 = vmatpush1.msra.mxu0 0.0
        %841 = vmatprep.subr.mxu0 0.0
        %842 = vmatpush1.msra.mxu0 0.0
        %843 = vmatprep.subr.mxu0 0.0
        %844 = vmatpush1.msra.mxu0 0.0
        %845 = vmatprep.subr.mxu0 0.0
        %846 = vmatpush1.msra.mxu0 0.0
        %847 = vmatprep.mubr.f32.mxu0 0.0
        %848 = vmatmul.mubr.f32.gmra.mrb[0].mxu0 %v710
        %v849 = vpop.f32.mrb[0].mxu0
        %v850 = vadd.f32 %v707, %v849
        %v851 = vpop.f32.mrb[0].mxu0
        %v852 = vadd.f32 %v707, %v851
        %853 = vdwg.mxu0
        %854 = vmatprep.subr.mxu0 %v686
        %855 = vmatpush1.msra.mxu0 %v685
        %856 = vmatprep.subr.mxu0 %v694
        %857 = vmatpush1.msra.mxu0 %v693
        %858 = vmatprep.subr.mxu0 0.0
        %859 = vmatpush1.msra.mxu0 0.0
        %860 = vmatprep.subr.mxu0 0.0
        %861 = vmatpush1.msra.mxu0 0.0
        %862 = vmatprep.subr.mxu0 0.0
        %863 = vmatpush1.msra.mxu0 0.0
        %864 = vmatprep.subr.mxu0 0.0
        %865 = vmatpush1.msra.mxu0 0.0
        %866 = vmatprep.subr.mxu0 0.0
        %867 = vmatpush1.msra.mxu0 0.0
        %868 = vmatprep.subr.mxu0 0.0
        %869 = vmatpush1.msra.mxu0 0.0
        %870 = vmatprep.subr.mxu0 0.0
        %871 = vmatpush1.msra.mxu0 0.0
        %872 = vmatprep.subr.mxu0 0.0
        %873 = vmatpush1.msra.mxu0 0.0
        %874 = vmatprep.subr.mxu0 0.0
        %875 = vmatpush1.msra.mxu0 0.0
        %876 = vmatprep.subr.mxu0 0.0
        %877 = vmatpush1.msra.mxu0 0.0
        %878 = vmatprep.subr.mxu0 0.0
        %879 = vmatpush1.msra.mxu0 0.0
        %880 = vmatprep.subr.mxu0 0.0
        %881 = vmatpush1.msra.mxu0 0.0
        %882 = vmatprep.subr.mxu0 0.0
        %883 = vmatpush1.msra.mxu0 0.0
        %884 = vmatprep.subr.mxu0 0.0
        %885 = vmatpush1.msra.mxu0 0.0
        %886 = vmatprep.subr.mxu0 0.0
        %887 = vmatpush1.msra.mxu0 0.0
        %888 = vmatprep.subr.mxu0 0.0
        %889 = vmatpush1.msra.mxu0 0.0
        %890 = vmatprep.subr.mxu0 0.0
        %891 = vmatpush1.msra.mxu0 0.0
        %892 = vmatprep.subr.mxu0 0.0
        %893 = vmatpush1.msra.mxu0 0.0
        %894 = vmatprep.subr.mxu0 0.0
        %895 = vmatpush1.msra.mxu0 0.0
        %896 = vmatprep.subr.mxu0 0.0
        %897 = vmatpush1.msra.mxu0 0.0
        %898 = vmatprep.subr.mxu0 0.0
        %899 = vmatpush1.msra.mxu0 0.0
        %900 = vmatprep.subr.mxu0 0.0
        %901 = vmatpush1.msra.mxu0 0.0
        %902 = vmatprep.subr.mxu0 0.0
        %903 = vmatpush1.msra.mxu0 0.0
        %904 = vmatprep.subr.mxu0 0.0
        %905 = vmatpush1.msra.mxu0 0.0
        %906 = vmatprep.subr.mxu0 0.0
        %907 = vmatpush1.msra.mxu0 0.0
        %908 = vmatprep.subr.mxu0 0.0
        %909 = vmatpush1.msra.mxu0 0.0
        %910 = vmatprep.subr.mxu0 0.0
        %911 = vmatpush1.msra.mxu0 0.0
        %912 = vmatprep.subr.mxu0 0.0
        %913 = vmatpush1.msra.mxu0 0.0
        %914 = vmatprep.subr.mxu0 0.0
        %915 = vmatpush1.msra.mxu0 0.0
        %916 = vmatprep.subr.mxu0 0.0
        %917 = vmatpush1.msra.mxu0 0.0
        %918 = vmatprep.mubr.f32.mxu0 0.0
        %919 = vmatmul.mubr.f32.gmra.mrb[0].mxu0 %v710
        %v920 = vpop.f32.mrb[0].mxu0
        %v921 = vadd.f32 %v707, %v920
        %v922 = vpop.f32.mrb[0].mxu0
        %v923 = vadd.f32 %v707, %v922
        %924 = vdwg.mxu0
        %925 = vmatprep.subr.mxu0 %v688
        %926 = vmatpush1.msra.mxu0 %v687
        %927 = vmatprep.subr.mxu0 %v696
        %928 = vmatpush1.msra.mxu0 %v695
        %929 = vmatprep.subr.mxu0 0.0
        %930 = vmatpush1.msra.mxu0 0.0
        %931 = vmatprep.subr.mxu0 0.0
        %932 = vmatpush1.msra.mxu0 0.0
        %933 = vmatprep.subr.mxu0 0.0
        %934 = vmatpush1.msra.mxu0 0.0
        %935 = vmatprep.subr.mxu0 0.0
        %936 = vmatpush1.msra.mxu0 0.0
        %937 = vmatprep.subr.mxu0 0.0
        %938 = vmatpush1.msra.mxu0 0.0
        %939 = vmatprep.subr.mxu0 0.0
        %940 = vmatpush1.msra.mxu0 0.0
        %941 = vmatprep.subr.mxu0 0.0
        %942 = vmatpush1.msra.mxu0 0.0
        %943 = vmatprep.subr.mxu0 0.0
        %944 = vmatpush1.msra.mxu0 0.0
        %945 = vmatprep.subr.mxu0 0.0
        %946 = vmatpush1.msra.mxu0 0.0
        %947 = vmatprep.subr.mxu0 0.0
        %948 = vmatpush1.msra.mxu0 0.0
        %949 = vmatprep.subr.mxu0 0.0
        %950 = vmatpush1.msra.mxu0 0.0
        %951 = vmatprep.subr.mxu0 0.0
        %952 = vmatpush1.msra.mxu0 0.0
        %953 = vmatprep.subr.mxu0 0.0
        %954 = vmatpush1.msra.mxu0 0.0
        %955 = vmatprep.subr.mxu0 0.0
        %956 = vmatpush1.msra.mxu0 0.0
        %957 = vmatprep.subr.mxu0 0.0
        %958 = vmatpush1.msra.mxu0 0.0
        %959 = vmatprep.subr.mxu0 0.0
        %960 = vmatpush1.msra.mxu0 0.0
        %961 = vmatprep.subr.mxu0 0.0
        %962 = vmatpush1.msra.mxu0 0.0
        %963 = vmatprep.subr.mxu0 0.0
        %964 = vmatpush1.msra.mxu0 0.0
        %965 = vmatprep.subr.mxu0 0.0
        %966 = vmatpush1.msra.mxu0 0.0
        %967 = vmatprep.subr.mxu0 0.0
        %968 = vmatpush1.msra.mxu0 0.0
        %969 = vmatprep.subr.mxu0 0.0
        %970 = vmatpush1.msra.mxu0 0.0
        %971 = vmatprep.subr.mxu0 0.0
        %972 = vmatpush1.msra.mxu0 0.0
        %973 = vmatprep.subr.mxu0 0.0
        %974 = vmatpush1.msra.mxu0 0.0
        %975 = vmatprep.subr.mxu0 0.0
        %976 = vmatpush1.msra.mxu0 0.0
        %977 = vmatprep.subr.mxu0 0.0
        %978 = vmatpush1.msra.mxu0 0.0
        %979 = vmatprep.subr.mxu0 0.0
        %980 = vmatpush1.msra.mxu0 0.0
        %981 = vmatprep.subr.mxu0 0.0
        %982 = vmatpush1.msra.mxu0 0.0
        %983 = vmatprep.subr.mxu0 0.0
        %984 = vmatpush1.msra.mxu0 0.0
        %985 = vmatprep.subr.mxu0 0.0
        %986 = vmatpush1.msra.mxu0 0.0
        %987 = vmatprep.subr.mxu0 0.0
        %988 = vmatpush1.msra.mxu0 0.0
        %989 = vmatprep.mubr.f32.mxu0 0.0
        %990 = vmatmul.mubr.f32.gmra.mrb[0].mxu0 %v710
        %v991 = vpop.f32.mrb[0].mxu0
        %v992 = vadd.f32 %v707, %v991
        %v993 = vpop.f32.mrb[0].mxu0
        %v994 = vadd.f32 %v707, %v993
        %995 = vdwg.mxu0
        %v1004 = vcombine.low %v779, %v781
        %v1005 = vcombine.low %v850, %v852
        %v1006 = vcombine.low %v921, %v923
        %v1007 = vcombine.low %v992, %v994
        %v1009 = vunpack.c.l.s4 1966171168
        %v1010 = vunpack.c.0.s8 %v1009
        %v1011 = vlaneseq
        %v1012 = vshrl.u32 %v1011, 7
        %v1013 = vsub.s32 %v1010, %v1012
        %v1014 = vrot.slane %v1004, %v1013
        %v1016 = vunpack.c.l.s4 1966171168
        %v1017 = vunpack.c.0.s8 %v1016
        %v1018 = vlaneseq
        %v1019 = vshrl.u32 %v1018, 7
        %v1020 = vsub.s32 %v1017, %v1019
        %v1021 = vrot.slane %v1005, %v1020
        %v1023 = vunpack.c.l.s4 1966171168
        %v1024 = vunpack.c.0.s8 %v1023
        %v1025 = vlaneseq
        %v1026 = vshrl.u32 %v1025, 7
        %v1027 = vsub.s32 %v1024, %v1026
        %v1028 = vrot.slane %v1006, %v1027
        %v1030 = vunpack.c.l.s4 1966171168
        %v1031 = vunpack.c.0.s8 %v1030
        %v1032 = vlaneseq
        %v1033 = vshrl.u32 %v1032, 7
        %v1034 = vsub.s32 %v1031, %v1033
        %v1035 = vrot.slane %v1007, %v1034
        %v1036 = vcombine.low %v1014, %v1021
        %v1037 = vcombine.low %v1028, %v1035
        %v1039 = vunpack.c.l.s4 1966171168
        %v1040 = vunpack.c.0.s8 %v1039
        %v1041 = vlaneseq
        %v1042 = vshrl.u32 %v1041, 7
        %v1043 = vsub.s32 %v1040, %v1042
        %v1044 = vrot.slane %v1036, %v1043
        %v1046 = vunpack.c.l.s4 1966171168
        %v1047 = vunpack.c.0.s8 %v1046
        %v1048 = vlaneseq
        %v1049 = vshrl.u32 %v1048, 7
        %v1050 = vsub.s32 %v1047, %v1049
        %v1051 = vrot.slane %v1037, %v1050
        %v1052 = vcombine.low %v1044, %v1051
        %s1054 = sshra.s32 %s26, 2
        %s1055 = sand.u32 %s26, 3
        %s1056 = sshra.s32 %s26, 2
        %s1057 = sand.u32 %s26, 3
        %s1058 = smul.u32 %s1054, 8
        %s1059 = smul.u32 %s1058, 4
        %s1060 = sadd.s32 %s1059, %s1057
        %s1061 = scalar_lea.vmem %s374, %s1060
        %1062 = vst [vmem:[%s1061] ss:$4 sm:$0xff] %v1052
        %v1063 = vld [vmem:[#allocation2] sm:$0x1]
        %vm1064 = vcmask 1040384
        %v1065 = vsel %vm1064, %v779, -inf
        %v1066 = vsel %vm1064, %v781, -inf
        %v1067 = vsel %vm1064, %v850, -inf
        %v1068 = vsel %vm1064, %v852, -inf
        %v1069 = vsel %vm1064, %v921, -inf
        %v1070 = vmax.f32 %v1065, %v1069
        %v1071 = vsel %vm1064, %v923, -inf
        %v1072 = vmax.f32 %v1066, %v1071
        %v1073 = vsel %vm1064, %v992, -inf
        %v1074 = vmax.f32 %v1067, %v1073
        %v1075 = vsel %vm1064, %v994, -inf
        %v1076 = vmax.f32 %v1068, %v1075
        %v1077 = vmax.f32 %v1070, %v1072
        %v1078 = vmax.f32 %v1074, %v1076
        %v1079 = vmax.f32 %v1077, %v1078
        %1080 = vmax.xlane.f32.xlu0 %v1079
        %v1081 = vpop.xlane.xlu0 %1080
        %v1082 = vmax.f32 %v1063, %v1081
        %v1083 = vsub.f32 %v1063, %v1082
        %v1084 = vmul.f32 %v1083, 1.442695
        %v1085 = vpow.pop %v1084
        %1087 = vset.pattern.permute.xlu0 0
        %1088 = vperm.xlu0 %1087, %v1082
        %v1089 = vpop.permute.xlu0 %1088
        %v1091 = vlaneseq
        %v1092 = vshrl.u32 %v1091, 7
        %v1093 = vsub.s32 0, %v1092
        %v1094 = vrot.slane %v1089, %v1093
        %v1095 = vsub.f32 %v779, %v1094
        %v1096 = vsub.f32 %v781, %v1094
        %v1097 = vsub.f32 %v850, %v1094
        %v1098 = vsub.f32 %v852, %v1094
        %v1099 = vsub.f32 %v921, %v1094
        %v1100 = vsub.f32 %v923, %v1094
        %v1101 = vsub.f32 %v992, %v1094
        %v1102 = vsub.f32 %v994, %v1094
        %v1103 = vmul.f32 %v1095, 1.442695
        %v1104 = vpow.pop %v1103
        %v1105 = vmul.f32 %v1096, 1.442695
        %v1106 = vpow.pop %v1105
        %v1107 = vmul.f32 %v1097, 1.442695
        %v1108 = vpow.pop %v1107
        %v1109 = vmul.f32 %v1098, 1.442695
        %v1110 = vpow.pop %v1109
        %v1111 = vmul.f32 %v1099, 1.442695
        %v1112 = vpow.pop %v1111
        %v1113 = vmul.f32 %v1100, 1.442695
        %v1114 = vpow.pop %v1113
        %v1115 = vmul.f32 %v1101, 1.442695
        %v1116 = vpow.pop %v1115
        %v1117 = vmul.f32 %v1102, 1.442695
        %v1118 = vpow.pop %v1117
        %v1119 = vld [vmem:[#allocation3] sm:$0x1]
        %v1120 = vmul.f32 %v1085, %v1119
        %v1121 = vsel %vm1064, %v1104, 0.0
        %v1122 = vsel %vm1064, %v1106, 0.0
        %v1123 = vadd.f32 %v1121, %v1122
        %v1124 = vsel %vm1064, %v1108, 0.0
        %v1125 = vadd.f32 %v1123, %v1124
        %v1126 = vsel %vm1064, %v1110, 0.0
        %v1127 = vadd.f32 %v1125, %v1126
        %v1128 = vsel %vm1064, %v1112, 0.0
        %v1129 = vadd.f32 %v1127, %v1128
        %v1130 = vsel %vm1064, %v1114, 0.0
        %v1131 = vadd.f32 %v1129, %v1130
        %v1132 = vsel %vm1064, %v1116, 0.0
        %v1133 = vadd.f32 %v1131, %v1132
        %v1134 = vsel %vm1064, %v1118, 0.0
        %v1135 = vadd.f32 %v1133, %v1134
        %1136 = vadd.xlane.f32.xlu0 %v1135
        %v1137 = vpop.xlane.xlu0 %1136
        %v1138 = vadd.f32 %v1120, %v1137
        %vm1139 = vcmask 0
        %1140 = vst.msk [vmem:[#allocation3] sm:$0x1] %vm1139, %v1138
        %v1141 = vld [vmem:[#allocation4] sm:$0xff]
        %v1143 = vlaneseq
        %v1144 = vshrl.u32 %v1143, 7
        %v1145 = vsub.s32 0, %v1144
        %v1146 = vrot.slane %v1085, %v1145
        %v1148 = vmul.f32 %v1146, %v1141
        %v1149 = vlaneseq
        %v1150 = vshrl.u32 %v1149, 7
        %v1151 = vsub.s32 0, %v1150
        %v1152 = vrot.slane %v1104, %v1151
        %v1153 = vlaneseq
        %v1154 = vshrl.u32 %v1153, 7
        %v1155 = vsub.s32 0, %v1154
        %v1156 = vrot.slane %v1106, %v1155
        %v1157 = vlaneseq
        %v1158 = vshrl.u32 %v1157, 7
        %v1159 = vsub.s32 0, %v1158
        %v1160 = vrot.slane %v1108, %v1159
        %v1161 = vlaneseq
        %v1162 = vshrl.u32 %v1161, 7
        %v1163 = vsub.s32 0, %v1162
        %v1164 = vrot.slane %v1110, %v1163
        %v1165 = vlaneseq
        %v1166 = vshrl.u32 %v1165, 7
        %v1167 = vsub.s32 0, %v1166
        %v1168 = vrot.slane %v1112, %v1167
        %v1169 = vlaneseq
        %v1170 = vshrl.u32 %v1169, 7
        %v1171 = vsub.s32 0, %v1170
        %v1172 = vrot.slane %v1114, %v1171
        %v1173 = vlaneseq
        %v1174 = vshrl.u32 %v1173, 7
        %v1175 = vsub.s32 0, %v1174
        %v1176 = vrot.slane %v1116, %v1175
        %v1177 = vlaneseq
        %v1178 = vshrl.u32 %v1177, 7
        %v1179 = vsub.s32 0, %v1178
        %v1180 = vrot.slane %v1118, %v1179
        %v1181 = vmul.f32 %v393, %v1152
        %v1182 = vmul.f32 %v394, %v1156
        %v1183 = vmul.f32 %v395, %v1160
        %v1184 = vmul.f32 %v396, %v1164
        %v1185 = vmul.f32 %v397, %v1168
        %v1186 = vmul.f32 %v398, %v1172
        %v1187 = vmul.f32 %v399, %v1176
        %v1188 = vmul.f32 %v400, %v1180
        %v1189 = vadd.f32 %v1181, %v1182
        %v1190 = vadd.f32 %v1189, %v1183
        %v1191 = vadd.f32 %v1190, %v1184
        %v1192 = vadd.f32 %v1191, %v1185
        %v1193 = vadd.f32 %v1192, %v1186
        %v1194 = vadd.f32 %v1193, %v1187
        %v1195 = vadd.f32 %v1194, %v1188
        %1196 = vadd.xlane.f32.xlu0 %v1195
        %v1197 = vpop.xlane.xlu0 %1196
        %v1198 = vadd.f32 %v1148, %v1197
        %vm1199 = vcmask 7168
        %1200 = vst.msk [vmem:[#allocation4] sm:$0xff] %vm1199, %v1198
        %1201 = vst.msk [vmem:[#allocation2] sm:$0x1] %vm1139, %v1082
        %p1202 = scmp.eq.s32.totalorder %s26, 3
        // Predicated region
        $region72: #{attention_layer_3d.1} parent=62 // pred_check
          %p1203 = pneg %p1202
        $region73: #{attention_layer_3d.1} parent=62 // pred_check_branch
          %1205 = sbr.rel (%p1203) target = $region75
        $region74: #{attention_layer_3d.1} parent=62 // pred_region
          %v1206 = vld [vmem:[#allocation3] sm:$0x1]
          %v1207 = vrcp.pop %v1206
          %v1208 = vld [vmem:[%s374] sm:$0xff]
          %v1209 = vld [vmem:[%s374 + $0x8] sm:$0xff]
          %v1210 = vld [vmem:[%s374 + $0x10] sm:$0xff]
          %v1211 = vld [vmem:[%s374 + $0x18] sm:$0xff]
          %v1212 = vld [vmem:[#allocation2] sm:$0x1]
          %v1214 = vlaneseq
          %v1215 = vshrl.u32 %v1214, 7
          %v1216 = vsub.s32 0, %v1215
          %v1217 = vrot.slane %v1212, %v1216
          %1218 = vset.pattern.permute.xlu0 0
          %1219 = vperm.xlu0 %1218, %v1217
          %v1220 = vpop.permute.xlu0 %1219
          %v1222 = vsub.f32 %v1208, %v1220
          %v1223 = vsub.f32 %v1209, %v1220
          %v1224 = vsub.f32 %v1210, %v1220
          %v1225 = vsub.f32 %v1211, %v1220
          %v1226 = vmul.f32 %v1222, 1.442695
          %v1227 = vpow.pop %v1226
          %v1228 = vmul.f32 %v1223, 1.442695
          %v1229 = vpow.pop %v1228
          %v1230 = vmul.f32 %v1224, 1.442695
          %v1231 = vpow.pop %v1230
          %v1232 = vmul.f32 %v1225, 1.442695
          %v1233 = vpow.pop %v1232
          %v1235 = vlaneseq
          %v1236 = vshrl.u32 %v1235, 7
          %v1237 = vsub.s32 0, %v1236
          %v1238 = vrot.slane %v1207, %v1237
          %1239 = vset.pattern.permute.xlu0 0
          %1240 = vperm.xlu0 %1239, %v1238
          %v1241 = vpop.permute.xlu0 %1240
          %v1243 = vmul.f32 %v1227, %v1241
          %v1244 = vmul.f32 %v1229, %v1241
          %v1245 = vmul.f32 %v1231, %v1241
          %v1246 = vmul.f32 %v1233, %v1241
          %1247 = vst [vmem:[%s374] sm:$0xff] %v1243
          %1248 = vst [vmem:[%s374 + $0x8] sm:$0xff] %v1244
          %1249 = vst [vmem:[%s374 + $0x10] sm:$0xff] %v1245
          %1250 = vst [vmem:[%s374 + $0x18] sm:$0xff] %v1246
          %v1251 = vld [vmem:[#allocation4] sm:$0xff]
          %v1252 = vmul.f32 %v1207, 0.00024414063
          %v1254 = vlaneseq
          %v1255 = vshrl.u32 %v1254, 7
          %v1256 = vsub.s32 0, %v1255
          %v1257 = vrot.slane %v1252, %v1256
          %v1259 = vmul.f32 %v1251, %v1257
          %1260 = vst.msk [vmem:[%s378] sm:$0xff] %vm1199, %v1259
        $region75: #{attention_layer_3d.1} parent=62 // pred_fallthru
          _
        %p1261 = scmp.lt.s32.totalorder %s25, 1
        %s1262 = scalar_select %p1261, %s25, 1
        %s1263 = smul.addr %s1262, 8
        %s1264 = smul.addr %s1263, 4
        %s1265 = scalar_lea.vmem %s6, %s1264
        %p1266 = scmp.lt.s32.totalorder %s25, 1
        %s1267 = scalar_select %p1266, %s25, 1
        %s1268 = smul.addr %s1267, 8
        %s1269 = scalar_lea.vmem %s7, %s1268
        // Predicated region
        $region76: #{attention_layer_3d.1} parent=62 // pred_check
          %p1270 = pneg %p191
        $region77: #{attention_layer_3d.1} parent=62 // pred_check_branch
          %1272 = sbr.rel (%p1270) target = $region79
        $region78: #{attention_layer_3d.1} parent=62 // pred_region
          _
        $region79: #{attention_layer_3d.1} parent=62 // pred_fallthru
          _
        // Predicated region
        $region80: #{attention_layer_3d.1} parent=62 // pred_check
          %p1273 = pneg %p217
        $region81: #{attention_layer_3d.1} parent=62 // pred_check_branch
          %1275 = sbr.rel (%p1273) target = $region83
        $region82: #{attention_layer_3d.1} parent=62 // pred_region
          _
        $region83: #{attention_layer_3d.1} parent=62 // pred_fallthru
          _
      $region63: #{attention_layer_3d.1} parent=5 // pred_fallthru
        _
      %p1276 = scmp.le.s32.totalorder 2, %s16
      // Predicated region
      $region84: #{attention_layer_3d.1} parent=5 // pred_check
        %p1277 = pneg %p1276
      $region85: #{attention_layer_3d.1} parent=5 // pred_check_branch
        %1279 = sbr.rel (%p1277) target = $region87
      $region86: #{attention_layer_3d.1} parent=5 // pred_region
        %s1280 = ssub.s32 %s16, 2
        // Predicated region
        $region88: #{attention_layer_3d.1} parent=86 // pred_check
          %p1281 = pneg %p197
        $region89: #{attention_layer_3d.1} parent=86 // pred_check_branch
          %1283 = sbr.rel (%p1281) target = $region91
        $region90: #{attention_layer_3d.1} parent=86 // pred_region
          %p1284 = scmp.lt.s32.totalorder %s27, 1
          %s1285 = scalar_select %p1284, %s27, 1
          %s1286 = smul.addr %s1285, 8
          %s1287 = smul.addr %s1286, 4
          %s1288 = scalar_lea.vmem %s6, %s1287
        $region91: #{attention_layer_3d.1} parent=86 // pred_fallthru
          _
        // Predicated region
        $region92: #{attention_layer_3d.1} parent=86 // pred_check
          %p1289 = pneg %p223
        $region93: #{attention_layer_3d.1} parent=86 // pred_check_branch
          %1291 = sbr.rel (%p1289) target = $region95
        $region94: #{attention_layer_3d.1} parent=86 // pred_region
          %p1292 = scmp.lt.s32.totalorder %s27, 1
          %s1293 = scalar_select %p1292, %s27, 1
          %s1294 = smul.addr %s1293, 8
          %s1295 = scalar_lea.vmem %s7, %s1294
        $region95: #{attention_layer_3d.1} parent=86 // pred_fallthru
          _
      $region87: #{attention_layer_3d.1} parent=5 // pred_fallthru
        _
    $region6: #{attention_layer_3d.1} parent=1 // loop_footer
      %s20 = sadd.s32 1, %s16
    $region7: #{attention_layer_3d.1} parent=1 // loop_footer_branch
      %15 = sbr.rel target = $region3
    $region8: #{attention_layer_3d.1} parent=1 // loop_exit
      _

</llo_original>
